<compile_context>
chip_gen: v5e
topology: v5e:2x2
jax: 0.10.0
libtpu: 0.0.40
codegen_flags: <defaults>
</compile_context>

<pallas_src>
import functools

import jax
import jax.numpy as jnp
from jax import lax
from jax.experimental import pallas as pl
from jax.experimental.pallas import tpu as pltpu


# ----------------------------- Pallas kernel -----------------------------

def _decoder_fused_kernel(x_ref, w1_ref, b1_ref, taps_ref, bfc_ref, w2_ref,
                          b2_ref, cmask_ref, o_ref, hbuf, *, width):
    """Fused conv1 -> polyphase ConvTranspose -> conv2 for one image.

    x_ref    : (1, Cin, L)        flattened NCHW input  (L = H*W)
    w1_ref   : (hid, Cin)         folded conv1 weight (left-multiply form)
    b1_ref   : (hid, 1)           folded conv1/BN bias
    taps_ref : (3, 3, hid, hid)   folded deconv taps, [ky, kx, out, in]
    bfc_ref  : (hid, 1)           folded deconv/BN bias
    w2_ref   : (Cout, hid)        folded conv2 weight
    b2_ref   : (Cout, 1)          folded conv2/BN bias
    cmask_ref: (1, L)             1.0 except 0.0 on the last column of each row
    o_ref    : (1, 2, 2, Cout, L) output phases [row parity, col parity]
    hbuf     : VMEM (hid, L + width + 1) scratch; zero tail = deconv halo
    """
    W = width
    L = x_ref.shape[2]

    # ---- conv1: 1x1 conv + BN + ReLU (channels-first matmul) ----
    xb = x_ref[0]                                               # (Cin, L)
    h = jnp.dot(w1_ref[...], xb, preferred_element_type=jnp.float32)
    h = jnp.maximum(h + b1_ref[...], 0.0)                       # (hid, L)

    # Stage h into a zero-tailed scratch so the (+1 row / +1 col) shifted views
    # (the transposed-conv halo must read zeros past the image) are plain
    # static lane-offset loads.
    hbuf[...] = jnp.zeros_like(hbuf)
    hbuf[:, 0:L] = h

    cmask = cmask_ref[...]                                      # (1, L)
    h00 = h
    h01 = hbuf[:, 1:L + 1] * cmask                              # h[m, n+1]
    h10 = hbuf[:, W:L + W]                                      # h[m+1, n]
    h11 = hbuf[:, W + 1:L + W + 1] * cmask                      # h[m+1, n+1]

    def mm(a, b):
        return jnp.dot(a, b, preferred_element_type=jnp.float32)

    # ---- full_conv: 2x2 polyphase decomposition of
    #      ConvTranspose2d(k=3, s=2, p=1, output_padding=1) ----
    p_ee = mm(taps_ref[1, 1], h00)
    p_eo = mm(taps_ref[1, 2], h00) + mm(taps_ref[1, 0], h01)
    p_oe = mm(taps_ref[2, 1], h00) + mm(taps_ref[0, 1], h10)
    p_oo = (mm(taps_ref[2, 2], h00) + mm(taps_ref[2, 0], h01)
            + mm(taps_ref[0, 2], h10) + mm(taps_ref[0, 0], h11))

    bfc = bfc_ref[...]
    w2 = w2_ref[...]
    b2 = b2_ref[...]

    def head(p):
        q = jnp.maximum(p + bfc, 0.0)                           # deconv BN+ReLU
        z = mm(w2, q) + b2                                      # conv2 + BN
        return jnp.maximum(z, 0.0).astype(o_ref.dtype)          # (Cout, L)

    # Dense (Cout, L) stores: Cout sublanes x >=256 lanes, no masked vst.
    o_ref[0, 0, 0] = head(p_ee)
    o_ref[0, 0, 1] = head(p_eo)
    o_ref[0, 1, 0] = head(p_oe)
    o_ref[0, 1, 1] = head(p_oo)


# ----------------------------- forward pass -----------------------------

def decoder_block(x_nchw, prepared):
    """x_nchw: (N, Cin, H, W) float32 -> (N, Cout, 2H, 2W) float32."""
    N, Cin, H, W = x_nchw.shape
    hid = prepared["w1"].shape[0]
    out_ch = prepared["w2"].shape[0]
    L = H * W
    lbuf = L + W + 1

    kernel = functools.partial(_decoder_fused_kernel, width=W)

    x_flat = x_nchw.reshape(N, Cin, L)                  # free (contiguous)
    colmask = (jnp.arange(L) % W != (W - 1)).astype(x_nchw.dtype).reshape(1, L)

    y_ph = pl.pallas_call(
        kernel,
        out_shape=jax.ShapeDtypeStruct((N, 2, 2, out_ch, L), x_nchw.dtype),
        grid_spec=pltpu.PrefetchScalarGridSpec(
            num_scalar_prefetch=0,
            grid=(N,),
            in_specs=[
                pl.BlockSpec((1, Cin, L), lambda n: (n, 0, 0)),
                pl.BlockSpec((hid, Cin), lambda n: (0, 0)),
                pl.BlockSpec((hid, 1), lambda n: (0, 0)),
                pl.BlockSpec((3, 3, hid, hid), lambda n: (0, 0, 0, 0)),
                pl.BlockSpec((hid, 1), lambda n: (0, 0)),
                pl.BlockSpec((out_ch, hid), lambda n: (0, 0)),
                pl.BlockSpec((out_ch, 1), lambda n: (0, 0)),
                pl.BlockSpec((1, L), lambda n: (0, 0)),
            ],
            out_specs=pl.BlockSpec((1, 2, 2, out_ch, L),
                                   lambda n: (n, 0, 0, 0, 0)),
            scratch_shapes=[pltpu.VMEM((hid, lbuf), jnp.float32)],
        ),
        compiler_params=pltpu.CompilerParams(
            dimension_semantics=("parallel",)),
    )(x_flat, prepared["w1"], prepared["b1"], prepared["taps"],
      prepared["bfc"], prepared["w2"], prepared["b2"], colmask)

    # Un-weave the 2x2 phases straight into NCHW (single transpose pass,
    # replacing the NHWC->NCHW transpose a channels-last layout would need).
    y = y_ph.reshape(N, 2, 2, out_ch, H, W)
    y = jnp.transpose(y, (0, 3, 4, 1, 5, 2)).reshape(N, out_ch, 2 * H, 2 * W)
    return y


# ----------------------------- parameter glue -----------------------------

def prepare_params(params, eps=1e-5):
    """One-time fold of eval-mode BN + re-layout into channels-first matmul form."""
    bn1, bn2, bn3 = params["bn1"], params["bn2"], params["bn3"]

    s1 = bn1["gamma"] / jnp.sqrt(bn1["var"] + eps)
    w1f = (params["w1"] * s1).T                                  # (hid, Cin)
    b1f = (bn1["beta"] - bn1["mean"] * s1).reshape(-1, 1)        # (hid, 1)

    s2 = bn2["gamma"] / jnp.sqrt(bn2["var"] + eps)
    # PyTorch ConvTranspose2d weight is (in, out, kH, kW); taps[ky,kx,o,i].
    taps = jnp.transpose(params["wt"], (2, 3, 1, 0)) * s2[None, None, :, None]
    bfc = ((params["bt"] - bn2["mean"]) * s2 + bn2["beta"]).reshape(-1, 1)

    s3 = bn3["gamma"] / jnp.sqrt(bn3["var"] + eps)
    w2f = (params["w2"] * s3).T                                  # (out, hid)
    b2f = (bn3["beta"] - bn3["mean"] * s3).reshape(-1, 1)        # (out, 1)

    return dict(w1=w1f, b1=b1f, taps=taps, bfc=bfc, w2=w2f, b2=b2f)


def fold_bn(w, conv_b, *, gamma, beta, mean, var, eps=1e-5):
    """Fold eval-mode BatchNorm into a conv whose trailing axis is Cout (ref only)."""
    scale = gamma / jnp.sqrt(var + eps)
    w_f = w * scale
    if conv_b is None:
        conv_b = jnp.zeros_like(mean)
    b_f = (conv_b - mean) * scale + beta
    return w_f, b_f.reshape(1, -1)


def init_params(key, in_ch, out_ch):
    hid = in_ch // 4
    ks = jax.random.split(key, 7)

    def bn(k, c):
        k1, k2, k3, k4 = jax.random.split(k, 4)
        return dict(gamma=jax.random.uniform(k1, (c,), minval=0.5, maxval=1.5),
                    beta=0.1 * jax.random.normal(k2, (c,)),
                    mean=0.1 * jax.random.normal(k3, (c,)),
                    var=jax.random.uniform(k4, (c,), minval=0.5, maxval=1.5))

    return dict(
        # conv1: PyTorch weight (hid, in, 1, 1) stored as matmul (in, hid)
        w1=0.2 * jax.random.normal(ks[0], (in_ch, hid)),
        bn1=bn(ks[1], hid),
        # full_conv: PyTorch ConvTranspose2d weight layout (in=hid, out=hid, 3, 3)
        wt=0.2 * jax.random.normal(ks[2], (hid, hid, 3, 3)),
        bt=0.05 * jax.random.normal(ks[3], (hid,)),
        bn2=bn(ks[4], hid),
        # conv2: PyTorch weight (out, hid, 1, 1) stored as matmul (hid, out)
        w2=0.2 * jax.random.normal(ks[5], (hid, out_ch)),
        bn3=bn(ks[6], out_ch),
    )


# pure-JAX reference (same math, XLA conv) used only for validation
def decoder_block_ref(x_nchw, params):
    x = jnp.transpose(x_nchw, (0, 2, 3, 1)).astype(jnp.float32)
    w1, b1 = fold_bn(params["w1"], None, **params["bn1"])
    h = jnp.maximum(jnp.einsum("nhwc,cd->nhwd", x, w1) + b1.reshape(-1), 0.0)
    w_hwio = jnp.flip(params["wt"], axis=(2, 3)).transpose(2, 3, 0, 1)
    w_fc, b_fc = fold_bn(w_hwio, params["bt"], **params["bn2"])
    h2 = lax.conv_general_dilated(
        h, w_fc, window_strides=(1, 1), padding=((1, 2), (1, 2)),
        lhs_dilation=(2, 2), dimension_numbers=("NHWC", "HWIO", "NHWC"))
    h2 = jnp.maximum(h2 + b_fc.reshape(-1), 0.0)
    w2, b2 = fold_bn(params["w2"], None, **params["bn3"])
    y = jnp.maximum(jnp.einsum("nhwc,cd->nhwd", h2, w2) + b2.reshape(-1), 0.0)
    return jnp.transpose(y, (0, 3, 1, 2))


if __name__ == "__main__":
    in_channels, out_channels = 16, 8        # hid = in_channels // 4 = 4
    N, H, W = 2, 16, 16
    key = jax.random.PRNGKey(0)
    kx, kp = jax.random.split(key)
    x = jax.random.normal(kx, (N, in_channels, H, W), jnp.float32)   # NCHW
    params = init_params(kp, in_channels, out_channels)
    prepared = prepare_params(params)

    fwd = jax.jit(decoder_block)
    y = jax.block_until_ready(fwd(x, prepared))
    y_ref = jax.block_until_ready(decoder_block_ref(x, params))

    assert y.shape == (N, out_channels, 2 * H, 2 * W), y.shape
    err = float(jnp.max(jnp.abs(y - y_ref)))
    assert jnp.allclose(y, y_ref, atol=1e-3, rtol=1e-3), err
    print("KERNEL_OK")
</pallas_src>

<mosaic_0001>
module attributes {stable_mosaic.version = 11 : i64} {
  func.func @_decoder_fused_kernel(%arg0: i32, %arg1: memref<1x16x256xf32, #tpu.memory_space<vmem>>, %arg2: memref<4x16xf32, #tpu.memory_space<vmem>>, %arg3: memref<4x1xf32, #tpu.memory_space<vmem>>, %arg4: memref<3x3x4x4xf32, #tpu.memory_space<vmem>>, %arg5: memref<4x1xf32, #tpu.memory_space<vmem>>, %arg6: memref<8x4xf32, #tpu.memory_space<vmem>>, %arg7: memref<8x1xf32, #tpu.memory_space<vmem>>, %arg8: memref<1x256xf32, #tpu.memory_space<vmem>>, %arg9: memref<1x2x2x8x256xf32, #tpu.memory_space<vmem>>, %arg10: memref<4x273xf32, #tpu.memory_space<vmem>>) attributes {dimension_semantics = [#tpu.dimension_semantics<parallel>], iteration_bounds = array<i64: 2>, scalar_prefetch = 0 : i64, scratch_operands = 1 : i64, tpu.core_type = #tpu.core_type<tc>, window_params = [{transform_indices = @transform_0, window_bounds = array<i64: 1, 16, 256>}, {pipeline_mode = #tpu.pipeline_mode<synchronous>, transform_indices = @transform_1, window_bounds = array<i64: 4, 16>}, {pipeline_mode = #tpu.pipeline_mode<synchronous>, transform_indices = @transform_2, window_bounds = array<i64: 4, 1>}, {pipeline_mode = #tpu.pipeline_mode<synchronous>, transform_indices = @transform_3, window_bounds = array<i64: 3, 3, 4, 4>}, {pipeline_mode = #tpu.pipeline_mode<synchronous>, transform_indices = @transform_4, window_bounds = array<i64: 4, 1>}, {pipeline_mode = #tpu.pipeline_mode<synchronous>, transform_indices = @transform_5, window_bounds = array<i64: 8, 4>}, {pipeline_mode = #tpu.pipeline_mode<synchronous>, transform_indices = @transform_6, window_bounds = array<i64: 8, 1>}, {pipeline_mode = #tpu.pipeline_mode<synchronous>, transform_indices = @transform_7, window_bounds = array<i64: 1, 256>}, {transform_indices = @transform_8, window_bounds = array<i64: 1, 2, 2, 8, 256>}]} {
    %c0 = arith.constant 0 : index
    %c0_0 = arith.constant 0 : index
    %c0_1 = arith.constant 0 : index
    %0 = vector.load %arg1[%c0, %c0_0, %c0_1] : memref<1x16x256xf32, #tpu.memory_space<vmem>>, vector<1x16x256xf32>
    %1 = vector.shape_cast %0 : vector<1x16x256xf32> to vector<16x256xf32>
    %c0_2 = arith.constant 0 : index
    %c0_3 = arith.constant 0 : index
    %2 = vector.load %arg2[%c0_2, %c0_3] : memref<4x16xf32, #tpu.memory_space<vmem>>, vector<4x16xf32>
    %cst = arith.constant dense<0.000000e+00> : vector<4x256xf32>
    %3 = tpu.matmul %2, %1, %cst {dimension_numbers = #tpu.dot_dimension_numbers<[1], [0], [0], [1], [0, 0, 1, 1], [], []>} : vector<4x16xf32>, vector<16x256xf32>, vector<4x256xf32> -> vector<4x256xf32>
    %c0_4 = arith.constant 0 : index
    %c0_5 = arith.constant 0 : index
    %4 = vector.load %arg3[%c0_4, %c0_5] : memref<4x1xf32, #tpu.memory_space<vmem>>, vector<4x1xf32>
    %5 = vector.broadcast %4 : vector<4x1xf32> to vector<4x256xf32>
    %6 = arith.addf %3, %5 : vector<4x256xf32>
    %cst_6 = arith.constant 0.000000e+00 : f32
    %7 = vector.broadcast %cst_6 : f32 to vector<4x256xf32>
    %8 = arith.maximumf %6, %7 : vector<4x256xf32>
    %cst_7 = arith.constant 0.000000e+00 : f32
    %9 = vector.broadcast %cst_7 : f32 to vector<4x273xf32>
    %c0_8 = arith.constant 0 : index
    %c0_9 = arith.constant 0 : index
    %10 = vector.load %arg10[%c0_8, %c0_9] : memref<4x273xf32, #tpu.memory_space<vmem>>, vector<4x273xf32>
    tpu.vector_store %arg10[%c0_8, %c0_9], %9 {strides = array<i32>} : memref<4x273xf32, #tpu.memory_space<vmem>>, vector<4x273xf32>,
    %c0_10 = arith.constant 0 : index
    %c0_11 = arith.constant 0 : index
    %11 = vector.load %arg10[%c0_10, %c0_11] : memref<4x273xf32, #tpu.memory_space<vmem>>, vector<4x256xf32>
    tpu.vector_store %arg10[%c0_10, %c0_11], %8 {strides = array<i32>} : memref<4x273xf32, #tpu.memory_space<vmem>>, vector<4x256xf32>,
    %c0_12 = arith.constant 0 : index
    %c0_13 = arith.constant 0 : index
    %12 = vector.load %arg8[%c0_12, %c0_13] : memref<1x256xf32, #tpu.memory_space<vmem>>, vector<1x256xf32>
    %c0_14 = arith.constant 0 : index
    %c1 = arith.constant 1 : index
    %13 = vector.load %arg10[%c0_14, %c1] : memref<4x273xf32, #tpu.memory_space<vmem>>, vector<4x256xf32>
    %14 = vector.broadcast %12 : vector<1x256xf32> to vector<4x256xf32>
    %15 = arith.mulf %13, %14 : vector<4x256xf32>
    %c0_15 = arith.constant 0 : index
    %c16 = arith.constant 16 : index
    %16 = vector.load %arg10[%c0_15, %c16] : memref<4x273xf32, #tpu.memory_space<vmem>>, vector<4x256xf32>
    %c0_16 = arith.constant 0 : index
    %c17 = arith.constant 17 : index
    %17 = vector.load %arg10[%c0_16, %c17] : memref<4x273xf32, #tpu.memory_space<vmem>>, vector<4x256xf32>
    %18 = vector.broadcast %12 : vector<1x256xf32> to vector<4x256xf32>
    %19 = arith.mulf %17, %18 : vector<4x256xf32>
    %c1_17 = arith.constant 1 : index
    %c1_18 = arith.constant 1 : index
    %c0_19 = arith.constant 0 : index
    %c0_20 = arith.constant 0 : index
    %20 = vector.load %arg4[%c1_17, %c1_18, %c0_19, %c0_20] : memref<3x3x4x4xf32, #tpu.memory_space<vmem>>, vector<1x1x4x4xf32>
    %21 = vector.shape_cast %20 : vector<1x1x4x4xf32> to vector<4x4xf32>
    %cst_21 = arith.constant dense<0.000000e+00> : vector<4x256xf32>
    %22 = tpu.matmul %21, %8, %cst_21 {dimension_numbers = #tpu.dot_dimension_numbers<[1], [0], [0], [1], [0, 0, 1, 1], [], []>} : vector<4x4xf32>, vector<4x256xf32>, vector<4x256xf32> -> vector<4x256xf32>
    %c1_22 = arith.constant 1 : index
    %c2 = arith.constant 2 : index
    %c0_23 = arith.constant 0 : index
    %c0_24 = arith.constant 0 : index
    %23 = vector.load %arg4[%c1_22, %c2, %c0_23, %c0_24] : memref<3x3x4x4xf32, #tpu.memory_space<vmem>>, vector<1x1x4x4xf32>
    %24 = vector.shape_cast %23 : vector<1x1x4x4xf32> to vector<4x4xf32>
    %cst_25 = arith.constant dense<0.000000e+00> : vector<4x256xf32>
    %25 = tpu.matmul %24, %8, %cst_25 {dimension_numbers = #tpu.dot_dimension_numbers<[1], [0], [0], [1], [0, 0, 1, 1], [], []>} : vector<4x4xf32>, vector<4x256xf32>, vector<4x256xf32> -> vector<4x256xf32>
    %c1_26 = arith.constant 1 : index
    %c0_27 = arith.constant 0 : index
    %c0_28 = arith.constant 0 : index
    %c0_29 = arith.constant 0 : index
    %26 = vector.load %arg4[%c1_26, %c0_27, %c0_28, %c0_29] : memref<3x3x4x4xf32, #tpu.memory_space<vmem>>, vector<1x1x4x4xf32>
    %27 = vector.shape_cast %26 : vector<1x1x4x4xf32> to vector<4x4xf32>
    %cst_30 = arith.constant dense<0.000000e+00> : vector<4x256xf32>
    %28 = tpu.matmul %27, %15, %cst_30 {dimension_numbers = #tpu.dot_dimension_numbers<[1], [0], [0], [1], [0, 0, 1, 1], [], []>} : vector<4x4xf32>, vector<4x256xf32>, vector<4x256xf32> -> vector<4x256xf32>
    %29 = arith.addf %25, %28 : vector<4x256xf32>
    %c2_31 = arith.constant 2 : index
    %c1_32 = arith.constant 1 : index
    %c0_33 = arith.constant 0 : index
    %c0_34 = arith.constant 0 : index
    %30 = vector.load %arg4[%c2_31, %c1_32, %c0_33, %c0_34] : memref<3x3x4x4xf32, #tpu.memory_space<vmem>>, vector<1x1x4x4xf32>
    %31 = vector.shape_cast %30 : vector<1x1x4x4xf32> to vector<4x4xf32>
    %cst_35 = arith.constant dense<0.000000e+00> : vector<4x256xf32>
    %32 = tpu.matmul %31, %8, %cst_35 {dimension_numbers = #tpu.dot_dimension_numbers<[1], [0], [0], [1], [0, 0, 1, 1], [], []>} : vector<4x4xf32>, vector<4x256xf32>, vector<4x256xf32> -> vector<4x256xf32>
    %c0_36 = arith.constant 0 : index
    %c1_37 = arith.constant 1 : index
    %c0_38 = arith.constant 0 : index
    %c0_39 = arith.constant 0 : index
    %33 = vector.load %arg4[%c0_36, %c1_37, %c0_38, %c0_39] : memref<3x3x4x4xf32, #tpu.memory_space<vmem>>, vector<1x1x4x4xf32>
    %34 = vector.shape_cast %33 : vector<1x1x4x4xf32> to vector<4x4xf32>
    %cst_40 = arith.constant dense<0.000000e+00> : vector<4x256xf32>
    %35 = tpu.matmul %34, %16, %cst_40 {dimension_numbers = #tpu.dot_dimension_numbers<[1], [0], [0], [1], [0, 0, 1, 1], [], []>} : vector<4x4xf32>, vector<4x256xf32>, vector<4x256xf32> -> vector<4x256xf32>
    %36 = arith.addf %32, %35 : vector<4x256xf32>
    %c2_41 = arith.constant 2 : index
    %c2_42 = arith.constant 2 : index
    %c0_43 = arith.constant 0 : index
    %c0_44 = arith.constant 0 : index
    %37 = vector.load %arg4[%c2_41, %c2_42, %c0_43, %c0_44] : memref<3x3x4x4xf32, #tpu.memory_space<vmem>>, vector<1x1x4x4xf32>
    %38 = vector.shape_cast %37 : vector<1x1x4x4xf32> to vector<4x4xf32>
    %cst_45 = arith.constant dense<0.000000e+00> : vector<4x256xf32>
    %39 = tpu.matmul %38, %8, %cst_45 {dimension_numbers = #tpu.dot_dimension_numbers<[1], [0], [0], [1], [0, 0, 1, 1], [], []>} : vector<4x4xf32>, vector<4x256xf32>, vector<4x256xf32> -> vector<4x256xf32>
    %c2_46 = arith.constant 2 : index
    %c0_47 = arith.constant 0 : index
    %c0_48 = arith.constant 0 : index
    %c0_49 = arith.constant 0 : index
    %40 = vector.load %arg4[%c2_46, %c0_47, %c0_48, %c0_49] : memref<3x3x4x4xf32, #tpu.memory_space<vmem>>, vector<1x1x4x4xf32>
    %41 = vector.shape_cast %40 : vector<1x1x4x4xf32> to vector<4x4xf32>
    %cst_50 = arith.constant dense<0.000000e+00> : vector<4x256xf32>
    %42 = tpu.matmul %41, %15, %cst_50 {dimension_numbers = #tpu.dot_dimension_numbers<[1], [0], [0], [1], [0, 0, 1, 1], [], []>} : vector<4x4xf32>, vector<4x256xf32>, vector<4x256xf32> -> vector<4x256xf32>
    %43 = arith.addf %39, %42 : vector<4x256xf32>
    %c0_51 = arith.constant 0 : index
    %c2_52 = arith.constant 2 : index
    %c0_53 = arith.constant 0 : index
    %c0_54 = arith.constant 0 : index
    %44 = vector.load %arg4[%c0_51, %c2_52, %c0_53, %c0_54] : memref<3x3x4x4xf32, #tpu.memory_space<vmem>>, vector<1x1x4x4xf32>
    %45 = vector.shape_cast %44 : vector<1x1x4x4xf32> to vector<4x4xf32>
    %cst_55 = arith.constant dense<0.000000e+00> : vector<4x256xf32>
    %46 = tpu.matmul %45, %16, %cst_55 {dimension_numbers = #tpu.dot_dimension_numbers<[1], [0], [0], [1], [0, 0, 1, 1], [], []>} : vector<4x4xf32>, vector<4x256xf32>, vector<4x256xf32> -> vector<4x256xf32>
    %47 = arith.addf %43, %46 : vector<4x256xf32>
    %c0_56 = arith.constant 0 : index
    %c0_57 = arith.constant 0 : index
    %c0_58 = arith.constant 0 : index
    %c0_59 = arith.constant 0 : index
    %48 = vector.load %arg4[%c0_56, %c0_57, %c0_58, %c0_59] : memref<3x3x4x4xf32, #tpu.memory_space<vmem>>, vector<1x1x4x4xf32>
    %49 = vector.shape_cast %48 : vector<1x1x4x4xf32> to vector<4x4xf32>
    %cst_60 = arith.constant dense<0.000000e+00> : vector<4x256xf32>
    %50 = tpu.matmul %49, %19, %cst_60 {dimension_numbers = #tpu.dot_dimension_numbers<[1], [0], [0], [1], [0, 0, 1, 1], [], []>} : vector<4x4xf32>, vector<4x256xf32>, vector<4x256xf32> -> vector<4x256xf32>
    %51 = arith.addf %47, %50 : vector<4x256xf32>
    %c0_61 = arith.constant 0 : index
    %c0_62 = arith.constant 0 : index
    %52 = vector.load %arg5[%c0_61, %c0_62] : memref<4x1xf32, #tpu.memory_space<vmem>>, vector<4x1xf32>
    %c0_63 = arith.constant 0 : index
    %c0_64 = arith.constant 0 : index
    %53 = vector.load %arg6[%c0_63, %c0_64] : memref<8x4xf32, #tpu.memory_space<vmem>>, vector<8x4xf32>
    %c0_65 = arith.constant 0 : index
    %c0_66 = arith.constant 0 : index
    %54 = vector.load %arg7[%c0_65, %c0_66] : memref<8x1xf32, #tpu.memory_space<vmem>>, vector<8x1xf32>
    %55 = vector.broadcast %52 : vector<4x1xf32> to vector<4x256xf32>
    %56 = arith.addf %22, %55 : vector<4x256xf32>
    %cst_67 = arith.constant 0.000000e+00 : f32
    %57 = vector.broadcast %cst_67 : f32 to vector<4x256xf32>
    %58 = arith.maximumf %56, %57 : vector<4x256xf32>
    %cst_68 = arith.constant dense<0.000000e+00> : vector<8x256xf32>
    %59 = tpu.matmul %53, %58, %cst_68 {dimension_numbers = #tpu.dot_dimension_numbers<[1], [0], [0], [1], [0, 0, 1, 1], [], []>} : vector<8x4xf32>, vector<4x256xf32>, vector<8x256xf32> -> vector<8x256xf32>
    %60 = vector.broadcast %54 : vector<8x1xf32> to vector<8x256xf32>
    %61 = arith.addf %59, %60 : vector<8x256xf32>
    %cst_69 = arith.constant 0.000000e+00 : f32
    %62 = vector.broadcast %cst_69 : f32 to vector<8x256xf32>
    %63 = arith.maximumf %61, %62 : vector<8x256xf32>
    %c0_70 = arith.constant 0 : index
    %c0_71 = arith.constant 0 : index
    %c0_72 = arith.constant 0 : index
    %c0_73 = arith.constant 0 : index
    %c0_74 = arith.constant 0 : index
    %64 = vector.load %arg9[%c0_70, %c0_71, %c0_72, %c0_73, %c0_74] : memref<1x2x2x8x256xf32, #tpu.memory_space<vmem>>, vector<1x1x1x8x256xf32>
    %65 = vector.shape_cast %64 : vector<1x1x1x8x256xf32> to vector<8x256xf32>
    %66 = vector.shape_cast %63 : vector<8x256xf32> to vector<1x1x1x8x256xf32>
    tpu.vector_store %arg9[%c0_70, %c0_71, %c0_72, %c0_73, %c0_74], %66 {strides = array<i32>} : memref<1x2x2x8x256xf32, #tpu.memory_space<vmem>>, vector<1x1x1x8x256xf32>,
    %67 = vector.broadcast %52 : vector<4x1xf32> to vector<4x256xf32>
    %68 = arith.addf %29, %67 : vector<4x256xf32>
    %cst_75 = arith.constant 0.000000e+00 : f32
    %69 = vector.broadcast %cst_75 : f32 to vector<4x256xf32>
    %70 = arith.maximumf %68, %69 : vector<4x256xf32>
    %cst_76 = arith.constant dense<0.000000e+00> : vector<8x256xf32>
    %71 = tpu.matmul %53, %70, %cst_76 {dimension_numbers = #tpu.dot_dimension_numbers<[1], [0], [0], [1], [0, 0, 1, 1], [], []>} : vector<8x4xf32>, vector<4x256xf32>, vector<8x256xf32> -> vector<8x256xf32>
    %72 = vector.broadcast %54 : vector<8x1xf32> to vector<8x256xf32>
    %73 = arith.addf %71, %72 : vector<8x256xf32>
    %cst_77 = arith.constant 0.000000e+00 : f32
    %74 = vector.broadcast %cst_77 : f32 to vector<8x256xf32>
    %75 = arith.maximumf %73, %74 : vector<8x256xf32>
    %c0_78 = arith.constant 0 : index
    %c0_79 = arith.constant 0 : index
    %c1_80 = arith.constant 1 : index
    %c0_81 = arith.constant 0 : index
    %c0_82 = arith.constant 0 : index
    %76 = vector.load %arg9[%c0_78, %c0_79, %c1_80, %c0_81, %c0_82] : memref<1x2x2x8x256xf32, #tpu.memory_space<vmem>>, vector<1x1x1x8x256xf32>
    %77 = vector.shape_cast %76 : vector<1x1x1x8x256xf32> to vector<8x256xf32>
    %78 = vector.shape_cast %75 : vector<8x256xf32> to vector<1x1x1x8x256xf32>
    tpu.vector_store %arg9[%c0_78, %c0_79, %c1_80, %c0_81, %c0_82], %78 {strides = array<i32>} : memref<1x2x2x8x256xf32, #tpu.memory_space<vmem>>, vector<1x1x1x8x256xf32>,
    %79 = vector.broadcast %52 : vector<4x1xf32> to vector<4x256xf32>
    %80 = arith.addf %36, %79 : vector<4x256xf32>
    %cst_83 = arith.constant 0.000000e+00 : f32
    %81 = vector.broadcast %cst_83 : f32 to vector<4x256xf32>
    %82 = arith.maximumf %80, %81 : vector<4x256xf32>
    %cst_84 = arith.constant dense<0.000000e+00> : vector<8x256xf32>
    %83 = tpu.matmul %53, %82, %cst_84 {dimension_numbers = #tpu.dot_dimension_numbers<[1], [0], [0], [1], [0, 0, 1, 1], [], []>} : vector<8x4xf32>, vector<4x256xf32>, vector<8x256xf32> -> vector<8x256xf32>
    %84 = vector.broadcast %54 : vector<8x1xf32> to vector<8x256xf32>
    %85 = arith.addf %83, %84 : vector<8x256xf32>
    %cst_85 = arith.constant 0.000000e+00 : f32
    %86 = vector.broadcast %cst_85 : f32 to vector<8x256xf32>
    %87 = arith.maximumf %85, %86 : vector<8x256xf32>
    %c0_86 = arith.constant 0 : index
    %c1_87 = arith.constant 1 : index
    %c0_88 = arith.constant 0 : index
    %c0_89 = arith.constant 0 : index
    %c0_90 = arith.constant 0 : index
    %88 = vector.load %arg9[%c0_86, %c1_87, %c0_88, %c0_89, %c0_90] : memref<1x2x2x8x256xf32, #tpu.memory_space<vmem>>, vector<1x1x1x8x256xf32>
    %89 = vector.shape_cast %88 : vector<1x1x1x8x256xf32> to vector<8x256xf32>
    %90 = vector.shape_cast %87 : vector<8x256xf32> to vector<1x1x1x8x256xf32>
    tpu.vector_store %arg9[%c0_86, %c1_87, %c0_88, %c0_89, %c0_90], %90 {strides = array<i32>} : memref<1x2x2x8x256xf32, #tpu.memory_space<vmem>>, vector<1x1x1x8x256xf32>,
    %91 = vector.broadcast %52 : vector<4x1xf32> to vector<4x256xf32>
    %92 = arith.addf %51, %91 : vector<4x256xf32>
    %cst_91 = arith.constant 0.000000e+00 : f32
    %93 = vector.broadcast %cst_91 : f32 to vector<4x256xf32>
    %94 = arith.maximumf %92, %93 : vector<4x256xf32>
    %cst_92 = arith.constant dense<0.000000e+00> : vector<8x256xf32>
    %95 = tpu.matmul %53, %94, %cst_92 {dimension_numbers = #tpu.dot_dimension_numbers<[1], [0], [0], [1], [0, 0, 1, 1], [], []>} : vector<8x4xf32>, vector<4x256xf32>, vector<8x256xf32> -> vector<8x256xf32>
    %96 = vector.broadcast %54 : vector<8x1xf32> to vector<8x256xf32>
    %97 = arith.addf %95, %96 : vector<8x256xf32>
    %cst_93 = arith.constant 0.000000e+00 : f32
    %98 = vector.broadcast %cst_93 : f32 to vector<8x256xf32>
    %99 = arith.maximumf %97, %98 : vector<8x256xf32>
    %c0_94 = arith.constant 0 : index
    %c1_95 = arith.constant 1 : index
    %c1_96 = arith.constant 1 : index
    %c0_97 = arith.constant 0 : index
    %c0_98 = arith.constant 0 : index
    %100 = vector.load %arg9[%c0_94, %c1_95, %c1_96, %c0_97, %c0_98] : memref<1x2x2x8x256xf32, #tpu.memory_space<vmem>>, vector<1x1x1x8x256xf32>
    %101 = vector.shape_cast %100 : vector<1x1x1x8x256xf32> to vector<8x256xf32>
    %102 = vector.shape_cast %99 : vector<8x256xf32> to vector<1x1x1x8x256xf32>
    tpu.vector_store %arg9[%c0_94, %c1_95, %c1_96, %c0_97, %c0_98], %102 {strides = array<i32>} : memref<1x2x2x8x256xf32, #tpu.memory_space<vmem>>, vector<1x1x1x8x256xf32>,
    return
  }
  func.func @transform_0(%arg0: i32) -> (i32, i32, i32) {
    %c0_i32 = arith.constant 0 : i32
    %c0_i32_0 = arith.constant 0 : i32
    %c0_i32_1 = arith.constant 0 : i32
    return %arg0, %c0_i32, %c0_i32_0 : i32, i32, i32
  }
  func.func @transform_1(%arg0: i32) -> (i32, i32) {
    %c0_i32 = arith.constant 0 : i32
    %c0_i32_0 = arith.constant 0 : i32
    %c0_i32_1 = arith.constant 0 : i32
    return %c0_i32, %c0_i32_0 : i32, i32
  }
  func.func @transform_2(%arg0: i32) -> (i32, i32) {
    %c0_i32 = arith.constant 0 : i32
    %c0_i32_0 = arith.constant 0 : i32
    %c0_i32_1 = arith.constant 0 : i32
    return %c0_i32, %c0_i32_0 : i32, i32
  }
  func.func @transform_3(%arg0: i32) -> (i32, i32, i32, i32) {
    %c0_i32 = arith.constant 0 : i32
    %c0_i32_0 = arith.constant 0 : i32
    %c0_i32_1 = arith.constant 0 : i32
    %c0_i32_2 = arith.constant 0 : i32
    %c0_i32_3 = arith.constant 0 : i32
    return %c0_i32, %c0_i32_0, %c0_i32_1, %c0_i32_2 : i32, i32, i32, i32
  }
  func.func @transform_4(%arg0: i32) -> (i32, i32) {
    %c0_i32 = arith.constant 0 : i32
    %c0_i32_0 = arith.constant 0 : i32
    %c0_i32_1 = arith.constant 0 : i32
    return %c0_i32, %c0_i32_0 : i32, i32
  }
  func.func @transform_5(%arg0: i32) -> (i32, i32) {
    %c0_i32 = arith.constant 0 : i32
    %c0_i32_0 = arith.constant 0 : i32
    %c0_i32_1 = arith.constant 0 : i32
    return %c0_i32, %c0_i32_0 : i32, i32
  }
  func.func @transform_6(%arg0: i32) -> (i32, i32) {
    %c0_i32 = arith.constant 0 : i32
    %c0_i32_0 = arith.constant 0 : i32
    %c0_i32_1 = arith.constant 0 : i32
    return %c0_i32, %c0_i32_0 : i32, i32
  }
  func.func @transform_7(%arg0: i32) -> (i32, i32) {
    %c0_i32 = arith.constant 0 : i32
    %c0_i32_0 = arith.constant 0 : i32
    %c0_i32_1 = arith.constant 0 : i32
    return %c0_i32, %c0_i32_0 : i32, i32
  }
  func.func @transform_8(%arg0: i32) -> (i32, i32, i32, i32, i32) {
    %c0_i32 = arith.constant 0 : i32
    %c0_i32_0 = arith.constant 0 : i32
    %c0_i32_1 = arith.constant 0 : i32
    %c0_i32_2 = arith.constant 0 : i32
    %c0_i32_3 = arith.constant 0 : i32
    return %arg0, %c0_i32, %c0_i32_0, %c0_i32_1, %c0_i32_2 : i32, i32, i32, i32, i32
  }
}

</mosaic_0001>

<llo_original>
// kernel: decoder_block.1
$region0: #{decoder_block.1}
  #allocation0 [shape = 'u32[]', space=smem, size = 0x4, offset = 0x4, fixed_abs, tag = 'smem constant byte address 0x4 - core index']
  #allocation1 [shape = 'u32[72,128]{1,0:T(1,128)}', space=vmem, size = 0x9000, scoped, tag = 'internal scratch']
  #allocation2 [shape = 'f32[4,273]{1,0:T(4,128)}', space=vmem, size = 0x1800, scoped, tag = 'scratch operand']
  %s0 = inlined_call_operand.vmem [shape: f32[2,16,256], index: 0, kind: input, shape index: {}]
  %s1 = inlined_call_operand.vmem [shape: f32[4,16], index: 1, kind: input, shape index: {}]
  %s2 = inlined_call_operand.vmem [shape: f32[4,1], index: 2, kind: input, shape index: {}]
  %s3 = inlined_call_operand.vmem [shape: f32[3,3,4,4], index: 3, kind: input, shape index: {}]
  %s4 = inlined_call_operand.vmem [shape: f32[4,1], index: 4, kind: input, shape index: {}]
  %s5 = inlined_call_operand.vmem [shape: f32[8,4], index: 5, kind: input, shape index: {}]
  %s6 = inlined_call_operand.vmem [shape: f32[8,1], index: 6, kind: input, shape index: {}]
  %s7 = inlined_call_operand.vmem [shape: f32[1,256], index: 7, kind: input, shape index: {}]
  %s8 = inlined_call_operand.vmem [shape: f32[2,2,2,8,256], index: 8, kind: output, shape index: {}]
  %s9 = sld [smem:[#allocation0]]
  $region65: #{decoder_block.1} parent=0
    _
  %s11 = ssub.s32 1, %s9
  %s12 = scalar_select 0, %s11, %s9
  loop: start=0, step=1, limit=4
  $region2: #{decoder_block.1} parent=0 // loop_pre_header
    _
  $region3: #{decoder_block.1} parent=0 // loop_header
    %s14 = sphi 0, %s18
    %p15 = scmp.ge.s32.totalorder %s14, 4
    %s24 = sphi 0, %s26
    %s27 = sphi 0, %s24
    %s28 = sphi 0, %s27
    %s44 = sphi 0, %s28
    %s48 = sphi 0, %s48
    %s50 = sphi 0, %s48
    %s51 = sphi 0, %s50
    %s65 = sphi 0, %s51
    %s69 = sphi 0, %s69
    %s71 = sphi 0, %s69
    %s72 = sphi 0, %s71
    %s86 = sphi 0, %s72
    %s90 = sphi 0, %s90
    %s92 = sphi 0, %s90
    %s93 = sphi 0, %s92
    %s107 = sphi 0, %s93
    %s111 = sphi 0, %s111
    %s113 = sphi 0, %s111
    %s114 = sphi 0, %s113
    %s128 = sphi 0, %s114
    %s132 = sphi 0, %s132
    %s134 = sphi 0, %s132
    %s135 = sphi 0, %s134
    %s149 = sphi 0, %s135
    %s153 = sphi 0, %s153
    %s155 = sphi 0, %s153
    %s156 = sphi 0, %s155
    %s170 = sphi 0, %s156
    %s174 = sphi 0, %s174
    %s176 = sphi 0, %s174
    %s177 = sphi 0, %s176
    %s191 = sphi 0, %s177
    %s197 = sphi 0, %s199
    %s200 = sphi 0, %s197
    %s201 = sphi 0, %s200
    %s217 = sphi 0, %s201
  $region4: #{decoder_block.1} parent=0 // loop_header_branch
    %17 = sbr.rel (%p15) target = $region8
  $region5: #{decoder_block.1} parent=0 // loop_body
    %s19 = ssub.s32 %s14, 1
    %s20 = ssub.s32 %s14, 2
    %s21 = sadd.s32 %s14, 1
    %s22 = ssub.s32 %s14, %s21
    %p23 = scmp.eq.s32.totalorder %s22, 0
    %s25 = sadd.s32 %s24, 1
    %s26 = scalar_select %p23, %s24, %s25
    %p29 = pneg %p23
    %p30 = scmp.eq.s32.totalorder %s14, 1
    %p31 = por %p29, %p30
    %p32 = scmp.ne.s32.totalorder %s24, %s27
    %p33 = scmp.eq.s32.totalorder %s14, 0
    %p34 = por %p32, %p33
    %p35 = scmp.ne.s32.totalorder %s24, %s27
    %p36 = scmp.eq.s32.totalorder %s19, 1
    %p37 = por %p35, %p36
    %p38 = scmp.ne.s32.totalorder %s27, %s28
    %p39 = scmp.eq.s32.totalorder %s19, 0
    %p40 = por %p38, %p39
    %p41 = scmp.ne.s32.totalorder %s27, %s28
    %p42 = scmp.eq.s32.totalorder %s20, 1
    %p43 = por %p41, %p42
    %p45 = scmp.ne.s32.totalorder %s28, %s44
    %p46 = scmp.eq.s32.totalorder %s20, 0
    %p47 = por %p45, %p46
    %s49 = sadd.s32 %s48, 1
    %p52 = scmp.eq.s32.totalorder %s14, 1
    %p53 = scmp.ne.s32.totalorder %s48, %s50
    %p54 = scmp.eq.s32.totalorder %s14, 0
    %p55 = por %p53, %p54
    %p56 = scmp.ne.s32.totalorder %s48, %s50
    %p57 = scmp.eq.s32.totalorder %s19, 1
    %p58 = por %p56, %p57
    %p59 = scmp.ne.s32.totalorder %s50, %s51
    %p60 = scmp.eq.s32.totalorder %s19, 0
    %p61 = por %p59, %p60
    %p62 = scmp.ne.s32.totalorder %s50, %s51
    %p63 = scmp.eq.s32.totalorder %s20, 1
    %p64 = por %p62, %p63
    %p66 = scmp.ne.s32.totalorder %s51, %s65
    %p67 = scmp.eq.s32.totalorder %s20, 0
    %p68 = por %p66, %p67
    %s70 = sadd.s32 %s69, 1
    %p73 = scmp.eq.s32.totalorder %s14, 1
    %p74 = scmp.ne.s32.totalorder %s69, %s71
    %p75 = scmp.eq.s32.totalorder %s14, 0
    %p76 = por %p74, %p75
    %p77 = scmp.ne.s32.totalorder %s69, %s71
    %p78 = scmp.eq.s32.totalorder %s19, 1
    %p79 = por %p77, %p78
    %p80 = scmp.ne.s32.totalorder %s71, %s72
    %p81 = scmp.eq.s32.totalorder %s19, 0
    %p82 = por %p80, %p81
    %p83 = scmp.ne.s32.totalorder %s71, %s72
    %p84 = scmp.eq.s32.totalorder %s20, 1
    %p85 = por %p83, %p84
    %p87 = scmp.ne.s32.totalorder %s72, %s86
    %p88 = scmp.eq.s32.totalorder %s20, 0
    %p89 = por %p87, %p88
    %s91 = sadd.s32 %s90, 1
    %p94 = scmp.eq.s32.totalorder %s14, 1
    %p95 = scmp.ne.s32.totalorder %s90, %s92
    %p96 = scmp.eq.s32.totalorder %s14, 0
    %p97 = por %p95, %p96
    %p98 = scmp.ne.s32.totalorder %s90, %s92
    %p99 = scmp.eq.s32.totalorder %s19, 1
    %p100 = por %p98, %p99
    %p101 = scmp.ne.s32.totalorder %s92, %s93
    %p102 = scmp.eq.s32.totalorder %s19, 0
    %p103 = por %p101, %p102
    %p104 = scmp.ne.s32.totalorder %s92, %s93
    %p105 = scmp.eq.s32.totalorder %s20, 1
    %p106 = por %p104, %p105
    %p108 = scmp.ne.s32.totalorder %s93, %s107
    %p109 = scmp.eq.s32.totalorder %s20, 0
    %p110 = por %p108, %p109
    %s112 = sadd.s32 %s111, 1
    %p115 = scmp.eq.s32.totalorder %s14, 1
    %p116 = scmp.ne.s32.totalorder %s111, %s113
    %p117 = scmp.eq.s32.totalorder %s14, 0
    %p118 = por %p116, %p117
    %p119 = scmp.ne.s32.totalorder %s111, %s113
    %p120 = scmp.eq.s32.totalorder %s19, 1
    %p121 = por %p119, %p120
    %p122 = scmp.ne.s32.totalorder %s113, %s114
    %p123 = scmp.eq.s32.totalorder %s19, 0
    %p124 = por %p122, %p123
    %p125 = scmp.ne.s32.totalorder %s113, %s114
    %p126 = scmp.eq.s32.totalorder %s20, 1
    %p127 = por %p125, %p126
    %p129 = scmp.ne.s32.totalorder %s114, %s128
    %p130 = scmp.eq.s32.totalorder %s20, 0
    %p131 = por %p129, %p130
    %s133 = sadd.s32 %s132, 1
    %p136 = scmp.eq.s32.totalorder %s14, 1
    %p137 = scmp.ne.s32.totalorder %s132, %s134
    %p138 = scmp.eq.s32.totalorder %s14, 0
    %p139 = por %p137, %p138
    %p140 = scmp.ne.s32.totalorder %s132, %s134
    %p141 = scmp.eq.s32.totalorder %s19, 1
    %p142 = por %p140, %p141
    %p143 = scmp.ne.s32.totalorder %s134, %s135
    %p144 = scmp.eq.s32.totalorder %s19, 0
    %p145 = por %p143, %p144
    %p146 = scmp.ne.s32.totalorder %s134, %s135
    %p147 = scmp.eq.s32.totalorder %s20, 1
    %p148 = por %p146, %p147
    %p150 = scmp.ne.s32.totalorder %s135, %s149
    %p151 = scmp.eq.s32.totalorder %s20, 0
    %p152 = por %p150, %p151
    %s154 = sadd.s32 %s153, 1
    %p157 = scmp.eq.s32.totalorder %s14, 1
    %p158 = scmp.ne.s32.totalorder %s153, %s155
    %p159 = scmp.eq.s32.totalorder %s14, 0
    %p160 = por %p158, %p159
    %p161 = scmp.ne.s32.totalorder %s153, %s155
    %p162 = scmp.eq.s32.totalorder %s19, 1
    %p163 = por %p161, %p162
    %p164 = scmp.ne.s32.totalorder %s155, %s156
    %p165 = scmp.eq.s32.totalorder %s19, 0
    %p166 = por %p164, %p165
    %p167 = scmp.ne.s32.totalorder %s155, %s156
    %p168 = scmp.eq.s32.totalorder %s20, 1
    %p169 = por %p167, %p168
    %p171 = scmp.ne.s32.totalorder %s156, %s170
    %p172 = scmp.eq.s32.totalorder %s20, 0
    %p173 = por %p171, %p172
    %s175 = sadd.s32 %s174, 1
    %p178 = scmp.eq.s32.totalorder %s14, 1
    %p179 = scmp.ne.s32.totalorder %s174, %s176
    %p180 = scmp.eq.s32.totalorder %s14, 0
    %p181 = por %p179, %p180
    %p182 = scmp.ne.s32.totalorder %s174, %s176
    %p183 = scmp.eq.s32.totalorder %s19, 1
    %p184 = por %p182, %p183
    %p185 = scmp.ne.s32.totalorder %s176, %s177
    %p186 = scmp.eq.s32.totalorder %s19, 0
    %p187 = por %p185, %p186
    %p188 = scmp.ne.s32.totalorder %s176, %s177
    %p189 = scmp.eq.s32.totalorder %s20, 1
    %p190 = por %p188, %p189
    %p192 = scmp.ne.s32.totalorder %s177, %s191
    %p193 = scmp.eq.s32.totalorder %s20, 0
    %p194 = por %p192, %p193
    %s195 = ssub.s32 %s14, %s21
    %p196 = scmp.eq.s32.totalorder %s195, 0
    %s198 = sadd.s32 %s197, 1
    %s199 = scalar_select %p196, %s197, %s198
    %p202 = pneg %p196
    %p203 = scmp.eq.s32.totalorder %s14, 1
    %p204 = por %p202, %p203
    %p205 = scmp.ne.s32.totalorder %s197, %s200
    %p206 = scmp.eq.s32.totalorder %s14, 0
    %p207 = por %p205, %p206
    %p208 = scmp.ne.s32.totalorder %s197, %s200
    %p209 = scmp.eq.s32.totalorder %s19, 1
    %p210 = por %p208, %p209
    %p211 = scmp.ne.s32.totalorder %s200, %s201
    %p212 = scmp.eq.s32.totalorder %s19, 0
    %p213 = por %p211, %p212
    %p214 = scmp.ne.s32.totalorder %s200, %s201
    %p215 = scmp.eq.s32.totalorder %s20, 1
    %p216 = por %p214, %p215
    %p218 = scmp.ne.s32.totalorder %s201, %s217
    %p219 = scmp.eq.s32.totalorder %s20, 0
    %p220 = por %p218, %p219
    %p221 = scmp.le.s32.totalorder 1, %s14
    %p222 = scmp.lt.s32.totalorder %s14, 3
    %p223 = pnand %p221, %p222
    %p224 = pneg %p223
    // Predicated region
    $region9: #{decoder_block.1} parent=5 // pred_check
      _
    $region10: #{decoder_block.1} parent=5 // pred_check_branch
      %226 = sbr.rel (%p223) target = $region12
    $region11: #{decoder_block.1} parent=5 // pred_region
      %s227 = ssub.s32 %s14, 1
      // Predicated region
      $region13: #{decoder_block.1} parent=11 // pred_check
        %p228 = pneg %p61
      $region14: #{decoder_block.1} parent=11 // pred_check_branch
        %230 = sbr.rel (%p228) target = $region16
      $region15: #{decoder_block.1} parent=11 // pred_region
        _
      $region16: #{decoder_block.1} parent=11 // pred_fallthru
        _
      // Predicated region
      $region17: #{decoder_block.1} parent=11 // pred_check
        %p231 = pneg %p82
      $region18: #{decoder_block.1} parent=11 // pred_check_branch
        %233 = sbr.rel (%p231) target = $region20
      $region19: #{decoder_block.1} parent=11 // pred_region
        _
      $region20: #{decoder_block.1} parent=11 // pred_fallthru
        _
      // Predicated region
      $region21: #{decoder_block.1} parent=11 // pred_check
        %p234 = pneg %p103
      $region22: #{decoder_block.1} parent=11 // pred_check_branch
        %236 = sbr.rel (%p234) target = $region24
      $region23: #{decoder_block.1} parent=11 // pred_region
        _
      $region24: #{decoder_block.1} parent=11 // pred_fallthru
        _
      // Predicated region
      $region25: #{decoder_block.1} parent=11 // pred_check
        %p237 = pneg %p124
      $region26: #{decoder_block.1} parent=11 // pred_check_branch
        %239 = sbr.rel (%p237) target = $region28
      $region27: #{decoder_block.1} parent=11 // pred_region
        _
      $region28: #{decoder_block.1} parent=11 // pred_fallthru
        _
      // Predicated region
      $region29: #{decoder_block.1} parent=11 // pred_check
        %p240 = pneg %p145
      $region30: #{decoder_block.1} parent=11 // pred_check_branch
        %242 = sbr.rel (%p240) target = $region32
      $region31: #{decoder_block.1} parent=11 // pred_region
        _
      $region32: #{decoder_block.1} parent=11 // pred_fallthru
        _
      // Predicated region
      $region33: #{decoder_block.1} parent=11 // pred_check
        %p243 = pneg %p166
      $region34: #{decoder_block.1} parent=11 // pred_check_branch
        %245 = sbr.rel (%p243) target = $region36
      $region35: #{decoder_block.1} parent=11 // pred_region
        _
      $region36: #{decoder_block.1} parent=11 // pred_fallthru
        _
      // Predicated region
      $region37: #{decoder_block.1} parent=11 // pred_check
        %p246 = pneg %p187
      $region38: #{decoder_block.1} parent=11 // pred_check_branch
        %248 = sbr.rel (%p246) target = $region40
      $region39: #{decoder_block.1} parent=11 // pred_region
        _
      $region40: #{decoder_block.1} parent=11 // pred_fallthru
        _
    $region12: #{decoder_block.1} parent=5 // pred_fallthru
      _
    %p249 = scmp.lt.s32.totalorder %s14, 2
    // Predicated region
    $region41: #{decoder_block.1} parent=5 // pred_check
      %p250 = pneg %p249
    $region42: #{decoder_block.1} parent=5 // pred_check_branch
      %252 = sbr.rel (%p250) target = $region44
    $region43: #{decoder_block.1} parent=5 // pred_region
      // Predicated region
      $region45: #{decoder_block.1} parent=43 // pred_check
        %p253 = pneg %p34
      $region46: #{decoder_block.1} parent=43 // pred_check_branch
        %255 = sbr.rel (%p253) target = $region48
      $region47: #{decoder_block.1} parent=43 // pred_region
        %p256 = scmp.lt.s32.totalorder %s14, 1
        %s257 = scalar_select %p256, %s14, 1
        %s258 = smul.addr %s257, 4
        %s259 = smul.addr %s258, 8
        %s260 = scalar_lea.vmem %s0, %s259
      $region48: #{decoder_block.1} parent=43 // pred_fallthru
        _
    $region44: #{decoder_block.1} parent=5 // pred_fallthru
      _
    %p261 = scmp.le.s32.totalorder 1, %s14
    %p262 = scmp.lt.s32.totalorder %s14, 3
    %p263 = pnand %p261, %p262
    %p264 = pneg %p263
    // Predicated region
    $region49: #{decoder_block.1} parent=5 // pred_check
      _
    $region50: #{decoder_block.1} parent=5 // pred_check_branch
      %266 = sbr.rel (%p263) target = $region52
    $region51: #{decoder_block.1} parent=5 // pred_region
      %s267 = ssub.s32 %s14, 1
      %p268 = scmp.lt.s32.totalorder %s19, 1
      %s269 = scalar_select %p268, %s19, 1
      %s270 = smul.addr %s269, 4
      %s271 = smul.addr %s270, 8
      %s272 = scalar_lea.vmem %s0, %s271
      %p273 = pneg %p40
      %p274 = pneg %p37
      %p275 = pneg %p61
      %p276 = pneg %p58
      %p277 = pneg %p82
      %p278 = pneg %p79
      %p279 = pneg %p103
      %p280 = pneg %p100
      %p281 = pneg %p124
      %p282 = pneg %p121
      %p283 = pneg %p145
      %p284 = pneg %p142
      %p285 = pneg %p166
      %p286 = pneg %p163
      %p287 = pneg %p187
      %p288 = pneg %p184
      %p289 = pneg %p213
      %p290 = pneg %p210
      %p291 = scmp.lt.s32.totalorder %s19, 1
      %s292 = scalar_select %p291, %s19, 1
      %s293 = smul.addr %s292, 8
      %s294 = smul.addr %s293, 8
      %s295 = scalar_lea.vmem %s8, %s294
      %p296 = scmp.lt.s32.totalorder %s19, 1
      %s297 = scalar_select %p296, %s19, 1
      %s298 = smul.addr %s297, 4
      %s299 = smul.addr %s298, 8
      %s300 = scalar_lea.vmem %s0, %s299
      %p301 = scmp.lt.s32.totalorder %s19, 1
      %s302 = scalar_select %p301, %s19, 1
      %s303 = smul.addr %s302, 8
      %s304 = smul.addr %s303, 8
      %s305 = scalar_lea.vmem %s8, %s304
      %v306 = vld [vmem:[%s300] sm:$0xff]
      %v307 = vld [vmem:[%s300 + $0x8] sm:$0xff]
      %v308 = vld [vmem:[%s300 + $0x10] sm:$0xff]
      %v309 = vld [vmem:[%s300 + $0x18] sm:$0xff]
      %v310 = vld [vmem:[%s1] sm:$0xf]
      %v311 = vld [vmem:[%s2] sm:$0xf]
      %313 = vset.pattern.permute.xlu0 0
      %314 = vperm.xlu0 %313, %v311
      %v315 = vpop.permute.xlu0 %314
      %vm317 = vcmask 130048
      %v319 = vsel %vm317, %v310, 0
      %321 = vmatpush.msra.mxu0 0.0
      %322 = vmatpush.msra.mxu0 0.0
      %323 = vmatpush.msra.mxu0 0.0
      %324 = vmatpush.msra.mxu0 0.0
      %325 = vmatpush.msra.mxu0 0.0
      %326 = vmatpush.msra.mxu0 0.0
      %327 = vmatpush.msra.mxu0 0.0
      %328 = vmatpush.msra.mxu0 0.0
      %329 = vmatpush.msra.mxu0 0.0
      %330 = vmatpush.msra.mxu0 0.0
      %331 = vmatpush.msra.mxu0 0.0
      %332 = vmatpush.msra.mxu0 0.0
      %333 = vmatpush.msra.mxu0 0.0
      %334 = vmatpush.msra.mxu0 0.0
      %335 = vmatpush.msra.mxu0 %v308
      %336 = vmatpush.msra.mxu0 %v306
      %337 = vmatmul.f32.gmra.mxu0 %v319
      %v338 = vpop.f32.mrf.mxu0
      %v339 = vadd.f32 %v315, %v338
      %340 = vdwg.mxu0
      %341 = vmatpush.msra.mxu0 0.0
      %342 = vmatpush.msra.mxu0 0.0
      %343 = vmatpush.msra.mxu0 0.0
      %344 = vmatpush.msra.mxu0 0.0
      %345 = vmatpush.msra.mxu0 0.0
      %346 = vmatpush.msra.mxu0 0.0
      %347 = vmatpush.msra.mxu0 0.0
      %348 = vmatpush.msra.mxu0 0.0
      %349 = vmatpush.msra.mxu0 0.0
      %350 = vmatpush.msra.mxu0 0.0
      %351 = vmatpush.msra.mxu0 0.0
      %352 = vmatpush.msra.mxu0 0.0
      %353 = vmatpush.msra.mxu0 0.0
      %354 = vmatpush.msra.mxu0 0.0
      %355 = vmatpush.msra.mxu0 %v309
      %356 = vmatpush.msra.mxu0 %v307
      %357 = vmatmul.f32.gmra.mxu0 %v319
      %v358 = vpop.f32.mrf.mxu0
      %v359 = vadd.f32 %v315, %v358
      %360 = vdwg.mxu0
      %v361 = vmax.f32 %v339, 0.0
      %v362 = vmax.f32 %v359, 0.0
      %363 = vst [vmem:[#allocation2] sm:$0xff] 0.0
      %vm364 = vcmask 134144
      %365 = vst.msk [vmem:[#allocation2 + $0x8] sm:$0xf] %vm364, 0.0
      %v368 = vrot.slane %v362, 4
      %vm369 = vcmask 1043456
      %v370 = vsel %vm369, %v361, %v368
      %372 = vst [vmem:[#allocation2] sm:$0xff] %v370
      %v373 = vld [vmem:[%s7] sm:$0x3]
      %v374 = vld [vmem:[#allocation2] sm:$0xff]
      %v375 = vld [vmem:[#allocation2 + $0x8] sm:$0xf]
      %v377 = vperm.slane %v373, 0
      %v378 = vperm.slane %v373, 1
      %v379 = vrot.slane %v378, 4
      %v380 = vsel %vm369, %v377, %v379
      %381 = vrot.lane.b32.xlu0 %v380, 1
      %v382 = vpop.permute.xlu0 %381
      %v383 = vrot.slane %v382, 4
      %vm384 = vcmask 7168
      %v385 = vsel %vm384, %v383, %v382
      %v388 = vmul.f32 %v374, %v385
      %v389 = vmul.f32 %v375, %v383
      %390 = vrot.lane.b32.xlu0 %v380, 17
      %v391 = vpop.permute.xlu0 %390
      %v392 = vrot.slane %v391, 4
      %vm393 = vcmask 138240
      %v394 = vsel %vm393, %v392, %v391
      %v397 = vmul.f32 %v374, %v394
      %v398 = vmul.f32 %v375, %v392
      %s399 = scalar_lea.vmem %s3, 16
      %v400 = vld [vmem:[%s399] sm:$0xf]
      %s401 = scalar_lea.vmem %s3, 20
      %v402 = vld [vmem:[%s401] sm:$0xf]
      %s403 = scalar_lea.vmem %s3, 12
      %v404 = vld [vmem:[%s403] sm:$0xf]
      %407 = vst [vmem:[#allocation1] ss:$2 sm:$0xff] %v388
      %s408 = scalar_lea.vmem [#allocation1], 16
      %409 = vst [vmem:[%s408] ss:$2 sm:$0xff] %v389
      %v410 = vld.sshfl [vmem:[#allocation1] sm:$0xff pattern:$0x75316420]
      %v411 = vld.sshfl [vmem:[#allocation1 + $0x8] sm:$0xff pattern:$0x75316420]
      %v412 = vld.sshfl [vmem:[#allocation1 + $0x10] sm:$0xff pattern:$0x75316420]
      %413 = vrot.lane.b32.xlu0 %v410, 127
      %v414 = vpop.permute.xlu0 %413
      %415 = vrot.lane.b32.xlu0 %v411, 127
      %v416 = vpop.permute.xlu0 %415
      %417 = vrot.lane.b32.xlu0 %v412, 127
      %v418 = vpop.permute.xlu0 %417
      %vm419 = vcmask 1039360
      %v420 = vsel %vm419, %v414, %v416
      %v421 = vsel %vm419, %v416, %v418
      %vm422 = vcmask 31744
      %v424 = vsel %vm422, %v404, 0
      %v426 = vsel %vm369, %v420, 0
      %v428 = vsel %vm369, %v421, 0
      %430 = vmatpush.msra.mxu0 0.0
      %431 = vmatpush.msra.mxu0 0.0
      %432 = vmatpush.msra.mxu0 0.0
      %433 = vmatpush.msra.mxu0 0.0
      %434 = vmatpush.msra.mxu0 0.0
      %435 = vmatpush.msra.mxu0 0.0
      %436 = vmatpush.msra.mxu0 0.0
      %437 = vmatpush.msra.mxu0 0.0
      %438 = vmatpush.msra.mxu0 0.0
      %439 = vmatpush.msra.mxu0 0.0
      %440 = vmatpush.msra.mxu0 0.0
      %441 = vmatpush.msra.mxu0 0.0
      %442 = vmatpush.msra.mxu0 0.0
      %443 = vmatpush.msra.mxu0 0.0
      %444 = vmatpush.msra.mxu0 0.0
      %445 = vmatpush.msra.mxu0 %v426
      %446 = vmatmul.f32.gmra.mxu0 %v424
      %v447 = vpop.f32.mrf.mxu0
      %v448 = vadd.f32 0.0, %v447
      %449 = vdwg.mxu0
      %450 = vmatpush.msra.mxu0 0.0
      %451 = vmatpush.msra.mxu0 0.0
      %452 = vmatpush.msra.mxu0 0.0
      %453 = vmatpush.msra.mxu0 0.0
      %454 = vmatpush.msra.mxu0 0.0
      %455 = vmatpush.msra.mxu0 0.0
      %456 = vmatpush.msra.mxu0 0.0
      %457 = vmatpush.msra.mxu0 0.0
      %458 = vmatpush.msra.mxu0 0.0
      %459 = vmatpush.msra.mxu0 0.0
      %460 = vmatpush.msra.mxu0 0.0
      %461 = vmatpush.msra.mxu0 0.0
      %462 = vmatpush.msra.mxu0 0.0
      %463 = vmatpush.msra.mxu0 0.0
      %464 = vmatpush.msra.mxu0 0.0
      %465 = vmatpush.msra.mxu0 %v428
      %466 = vmatmul.f32.gmra.mxu0 %v424
      %v467 = vpop.f32.mrf.mxu0
      %v468 = vadd.f32 0.0, %v467
      %469 = vdwg.mxu0
      %v471 = vsel %vm422, %v402, 0
      %v473 = vsel %vm369, %v361, 0
      %v475 = vsel %vm369, %v362, 0
      %477 = vmatpush.msra.mxu0 0.0
      %478 = vmatpush.msra.mxu0 0.0
      %479 = vmatpush.msra.mxu0 0.0
      %480 = vmatpush.msra.mxu0 0.0
      %481 = vmatpush.msra.mxu0 0.0
      %482 = vmatpush.msra.mxu0 0.0
      %483 = vmatpush.msra.mxu0 0.0
      %484 = vmatpush.msra.mxu0 0.0
      %485 = vmatpush.msra.mxu0 0.0
      %486 = vmatpush.msra.mxu0 0.0
      %487 = vmatpush.msra.mxu0 0.0
      %488 = vmatpush.msra.mxu0 0.0
      %489 = vmatpush.msra.mxu0 0.0
      %490 = vmatpush.msra.mxu0 0.0
      %491 = vmatpush.msra.mxu0 0.0
      %492 = vmatpush.msra.mxu0 %v473
      %493 = vmatmul.f32.gmra.mxu0 %v471
      %v494 = vpop.f32.mrf.mxu0
      %v495 = vadd.f32 %v448, %v494
      %496 = vdwg.mxu0
      %497 = vmatpush.msra.mxu0 0.0
      %498 = vmatpush.msra.mxu0 0.0
      %499 = vmatpush.msra.mxu0 0.0
      %500 = vmatpush.msra.mxu0 0.0
      %501 = vmatpush.msra.mxu0 0.0
      %502 = vmatpush.msra.mxu0 0.0
      %503 = vmatpush.msra.mxu0 0.0
      %504 = vmatpush.msra.mxu0 0.0
      %505 = vmatpush.msra.mxu0 0.0
      %506 = vmatpush.msra.mxu0 0.0
      %507 = vmatpush.msra.mxu0 0.0
      %508 = vmatpush.msra.mxu0 0.0
      %509 = vmatpush.msra.mxu0 0.0
      %510 = vmatpush.msra.mxu0 0.0
      %511 = vmatpush.msra.mxu0 0.0
      %512 = vmatpush.msra.mxu0 %v475
      %513 = vmatmul.f32.gmra.mxu0 %v471
      %v514 = vpop.f32.mrf.mxu0
      %v515 = vadd.f32 %v468, %v514
      %516 = vdwg.mxu0
      %s517 = scalar_lea.vmem %s3, 28
      %v518 = vld [vmem:[%s517] sm:$0xf]
      %s519 = scalar_lea.vmem %s3, 4
      %v520 = vld [vmem:[%s519] sm:$0xf]
      %523 = vst [vmem:[#allocation1] ss:$2 sm:$0xff] %v374
      %s524 = scalar_lea.vmem [#allocation1], 16
      %525 = vst [vmem:[%s524] ss:$2 sm:$0xff] %v375
      %v526 = vld.sshfl [vmem:[#allocation1] sm:$0xff pattern:$0x75316420]
      %v527 = vld.sshfl [vmem:[#allocation1 + $0x8] sm:$0xff pattern:$0x75316420]
      %v528 = vld.sshfl [vmem:[#allocation1 + $0x10] sm:$0xff pattern:$0x75316420]
      %529 = vrot.lane.b32.xlu0 %v526, 112
      %v530 = vpop.permute.xlu0 %529
      %531 = vrot.lane.b32.xlu0 %v527, 112
      %v532 = vpop.permute.xlu0 %531
      %533 = vrot.lane.b32.xlu0 %v528, 112
      %v534 = vpop.permute.xlu0 %533
      %vm535 = vcmask 916480
      %v536 = vsel %vm535, %v530, %v532
      %v537 = vsel %vm535, %v532, %v534
      %v539 = vsel %vm422, %v520, 0
      %v541 = vsel %vm369, %v536, 0
      %v543 = vsel %vm369, %v537, 0
      %545 = vmatpush.msra.mxu0 0.0
      %546 = vmatpush.msra.mxu0 0.0
      %547 = vmatpush.msra.mxu0 0.0
      %548 = vmatpush.msra.mxu0 0.0
      %549 = vmatpush.msra.mxu0 0.0
      %550 = vmatpush.msra.mxu0 0.0
      %551 = vmatpush.msra.mxu0 0.0
      %552 = vmatpush.msra.mxu0 0.0
      %553 = vmatpush.msra.mxu0 0.0
      %554 = vmatpush.msra.mxu0 0.0
      %555 = vmatpush.msra.mxu0 0.0
      %556 = vmatpush.msra.mxu0 0.0
      %557 = vmatpush.msra.mxu0 0.0
      %558 = vmatpush.msra.mxu0 0.0
      %559 = vmatpush.msra.mxu0 0.0
      %560 = vmatpush.msra.mxu0 %v541
      %561 = vmatmul.f32.gmra.mxu0 %v539
      %v562 = vpop.f32.mrf.mxu0
      %v563 = vadd.f32 0.0, %v562
      %564 = vdwg.mxu0
      %565 = vmatpush.msra.mxu0 0.0
      %566 = vmatpush.msra.mxu0 0.0
      %567 = vmatpush.msra.mxu0 0.0
      %568 = vmatpush.msra.mxu0 0.0
      %569 = vmatpush.msra.mxu0 0.0
      %570 = vmatpush.msra.mxu0 0.0
      %571 = vmatpush.msra.mxu0 0.0
      %572 = vmatpush.msra.mxu0 0.0
      %573 = vmatpush.msra.mxu0 0.0
      %574 = vmatpush.msra.mxu0 0.0
      %575 = vmatpush.msra.mxu0 0.0
      %576 = vmatpush.msra.mxu0 0.0
      %577 = vmatpush.msra.mxu0 0.0
      %578 = vmatpush.msra.mxu0 0.0
      %579 = vmatpush.msra.mxu0 0.0
      %580 = vmatpush.msra.mxu0 %v543
      %581 = vmatmul.f32.gmra.mxu0 %v539
      %v582 = vpop.f32.mrf.mxu0
      %v583 = vadd.f32 0.0, %v582
      %584 = vdwg.mxu0
      %v586 = vsel %vm422, %v518, 0
      %588 = vmatpush.msra.mxu0 0.0
      %589 = vmatpush.msra.mxu0 0.0
      %590 = vmatpush.msra.mxu0 0.0
      %591 = vmatpush.msra.mxu0 0.0
      %592 = vmatpush.msra.mxu0 0.0
      %593 = vmatpush.msra.mxu0 0.0
      %594 = vmatpush.msra.mxu0 0.0
      %595 = vmatpush.msra.mxu0 0.0
      %596 = vmatpush.msra.mxu0 0.0
      %597 = vmatpush.msra.mxu0 0.0
      %598 = vmatpush.msra.mxu0 0.0
      %599 = vmatpush.msra.mxu0 0.0
      %600 = vmatpush.msra.mxu0 0.0
      %601 = vmatpush.msra.mxu0 0.0
      %602 = vmatpush.msra.mxu0 0.0
      %603 = vmatpush.msra.mxu0 %v473
      %604 = vmatmul.f32.gmra.mxu0 %v586
      %v605 = vpop.f32.mrf.mxu0
      %v606 = vadd.f32 %v563, %v605
      %607 = vdwg.mxu0
      %608 = vmatpush.msra.mxu0 0.0
      %609 = vmatpush.msra.mxu0 0.0
      %610 = vmatpush.msra.mxu0 0.0
      %611 = vmatpush.msra.mxu0 0.0
      %612 = vmatpush.msra.mxu0 0.0
      %613 = vmatpush.msra.mxu0 0.0
      %614 = vmatpush.msra.mxu0 0.0
      %615 = vmatpush.msra.mxu0 0.0
      %616 = vmatpush.msra.mxu0 0.0
      %617 = vmatpush.msra.mxu0 0.0
      %618 = vmatpush.msra.mxu0 0.0
      %619 = vmatpush.msra.mxu0 0.0
      %620 = vmatpush.msra.mxu0 0.0
      %621 = vmatpush.msra.mxu0 0.0
      %622 = vmatpush.msra.mxu0 0.0
      %623 = vmatpush.msra.mxu0 %v475
      %624 = vmatmul.f32.gmra.mxu0 %v586
      %v625 = vpop.f32.mrf.mxu0
      %v626 = vadd.f32 %v583, %v625
      %627 = vdwg.mxu0
      %s628 = scalar_lea.vmem %s3, 32
      %v629 = vld [vmem:[%s628] sm:$0xf]
      %s630 = scalar_lea.vmem %s3, 24
      %v631 = vld [vmem:[%s630] sm:$0xf]
      %632 = vst [vmem:[#allocation1] ss:$2 sm:$0xff] %v388
      %s633 = scalar_lea.vmem [#allocation1], 16
      %634 = vst [vmem:[%s633] ss:$2 sm:$0xff] %v389
      %v635 = vld.sshfl [vmem:[#allocation1] sm:$0xff pattern:$0x75316420]
      %v636 = vld.sshfl [vmem:[#allocation1 + $0x8] sm:$0xff pattern:$0x75316420]
      %v637 = vld.sshfl [vmem:[#allocation1 + $0x10] sm:$0xff pattern:$0x75316420]
      %638 = vrot.lane.b32.xlu0 %v635, 127
      %v639 = vpop.permute.xlu0 %638
      %640 = vrot.lane.b32.xlu0 %v636, 127
      %v641 = vpop.permute.xlu0 %640
      %642 = vrot.lane.b32.xlu0 %v637, 127
      %v643 = vpop.permute.xlu0 %642
      %v644 = vsel %vm419, %v639, %v641
      %v645 = vsel %vm419, %v641, %v643
      %v647 = vsel %vm422, %v631, 0
      %v649 = vsel %vm369, %v644, 0
      %v651 = vsel %vm369, %v645, 0
      %653 = vmatpush.msra.mxu0 0.0
      %654 = vmatpush.msra.mxu0 0.0
      %655 = vmatpush.msra.mxu0 0.0
      %656 = vmatpush.msra.mxu0 0.0
      %657 = vmatpush.msra.mxu0 0.0
      %658 = vmatpush.msra.mxu0 0.0
      %659 = vmatpush.msra.mxu0 0.0
      %660 = vmatpush.msra.mxu0 0.0
      %661 = vmatpush.msra.mxu0 0.0
      %662 = vmatpush.msra.mxu0 0.0
      %663 = vmatpush.msra.mxu0 0.0
      %664 = vmatpush.msra.mxu0 0.0
      %665 = vmatpush.msra.mxu0 0.0
      %666 = vmatpush.msra.mxu0 0.0
      %667 = vmatpush.msra.mxu0 0.0
      %668 = vmatpush.msra.mxu0 %v649
      %669 = vmatmul.f32.gmra.mxu0 %v647
      %v670 = vpop.f32.mrf.mxu0
      %v671 = vadd.f32 0.0, %v670
      %672 = vdwg.mxu0
      %673 = vmatpush.msra.mxu0 0.0
      %674 = vmatpush.msra.mxu0 0.0
      %675 = vmatpush.msra.mxu0 0.0
      %676 = vmatpush.msra.mxu0 0.0
      %677 = vmatpush.msra.mxu0 0.0
      %678 = vmatpush.msra.mxu0 0.0
      %679 = vmatpush.msra.mxu0 0.0
      %680 = vmatpush.msra.mxu0 0.0
      %681 = vmatpush.msra.mxu0 0.0
      %682 = vmatpush.msra.mxu0 0.0
      %683 = vmatpush.msra.mxu0 0.0
      %684 = vmatpush.msra.mxu0 0.0
      %685 = vmatpush.msra.mxu0 0.0
      %686 = vmatpush.msra.mxu0 0.0
      %687 = vmatpush.msra.mxu0 0.0
      %688 = vmatpush.msra.mxu0 %v651
      %689 = vmatmul.f32.gmra.mxu0 %v647
      %v690 = vpop.f32.mrf.mxu0
      %v691 = vadd.f32 0.0, %v690
      %692 = vdwg.mxu0
      %v694 = vsel %vm422, %v629, 0
      %696 = vmatpush.msra.mxu0 0.0
      %697 = vmatpush.msra.mxu0 0.0
      %698 = vmatpush.msra.mxu0 0.0
      %699 = vmatpush.msra.mxu0 0.0
      %700 = vmatpush.msra.mxu0 0.0
      %701 = vmatpush.msra.mxu0 0.0
      %702 = vmatpush.msra.mxu0 0.0
      %703 = vmatpush.msra.mxu0 0.0
      %704 = vmatpush.msra.mxu0 0.0
      %705 = vmatpush.msra.mxu0 0.0
      %706 = vmatpush.msra.mxu0 0.0
      %707 = vmatpush.msra.mxu0 0.0
      %708 = vmatpush.msra.mxu0 0.0
      %709 = vmatpush.msra.mxu0 0.0
      %710 = vmatpush.msra.mxu0 0.0
      %711 = vmatpush.msra.mxu0 %v473
      %712 = vmatmul.f32.gmra.mxu0 %v694
      %v713 = vpop.f32.mrf.mxu0
      %v714 = vadd.f32 %v671, %v713
      %715 = vdwg.mxu0
      %716 = vmatpush.msra.mxu0 0.0
      %717 = vmatpush.msra.mxu0 0.0
      %718 = vmatpush.msra.mxu0 0.0
      %719 = vmatpush.msra.mxu0 0.0
      %720 = vmatpush.msra.mxu0 0.0
      %721 = vmatpush.msra.mxu0 0.0
      %722 = vmatpush.msra.mxu0 0.0
      %723 = vmatpush.msra.mxu0 0.0
      %724 = vmatpush.msra.mxu0 0.0
      %725 = vmatpush.msra.mxu0 0.0
      %726 = vmatpush.msra.mxu0 0.0
      %727 = vmatpush.msra.mxu0 0.0
      %728 = vmatpush.msra.mxu0 0.0
      %729 = vmatpush.msra.mxu0 0.0
      %730 = vmatpush.msra.mxu0 0.0
      %731 = vmatpush.msra.mxu0 %v475
      %732 = vmatmul.f32.gmra.mxu0 %v694
      %v733 = vpop.f32.mrf.mxu0
      %v734 = vadd.f32 %v691, %v733
      %735 = vdwg.mxu0
      %s736 = scalar_lea.vmem %s3, 8
      %v737 = vld [vmem:[%s736] sm:$0xf]
      %738 = vst [vmem:[#allocation1] ss:$2 sm:$0xff] %v374
      %s739 = scalar_lea.vmem [#allocation1], 16
      %740 = vst [vmem:[%s739] ss:$2 sm:$0xff] %v375
      %v741 = vld.sshfl [vmem:[#allocation1] sm:$0xff pattern:$0x75316420]
      %v742 = vld.sshfl [vmem:[#allocation1 + $0x8] sm:$0xff pattern:$0x75316420]
      %v743 = vld.sshfl [vmem:[#allocation1 + $0x10] sm:$0xff pattern:$0x75316420]
      %744 = vrot.lane.b32.xlu0 %v741, 112
      %v745 = vpop.permute.xlu0 %744
      %746 = vrot.lane.b32.xlu0 %v742, 112
      %v747 = vpop.permute.xlu0 %746
      %748 = vrot.lane.b32.xlu0 %v743, 112
      %v749 = vpop.permute.xlu0 %748
      %v750 = vsel %vm535, %v745, %v747
      %v751 = vsel %vm535, %v747, %v749
      %v753 = vsel %vm422, %v737, 0
      %v755 = vsel %vm369, %v750, 0
      %v757 = vsel %vm369, %v751, 0
      %759 = vmatpush.msra.mxu0 0.0
      %760 = vmatpush.msra.mxu0 0.0
      %761 = vmatpush.msra.mxu0 0.0
      %762 = vmatpush.msra.mxu0 0.0
      %763 = vmatpush.msra.mxu0 0.0
      %764 = vmatpush.msra.mxu0 0.0
      %765 = vmatpush.msra.mxu0 0.0
      %766 = vmatpush.msra.mxu0 0.0
      %767 = vmatpush.msra.mxu0 0.0
      %768 = vmatpush.msra.mxu0 0.0
      %769 = vmatpush.msra.mxu0 0.0
      %770 = vmatpush.msra.mxu0 0.0
      %771 = vmatpush.msra.mxu0 0.0
      %772 = vmatpush.msra.mxu0 0.0
      %773 = vmatpush.msra.mxu0 0.0
      %774 = vmatpush.msra.mxu0 %v755
      %775 = vmatmul.f32.gmra.mxu0 %v753
      %v776 = vpop.f32.mrf.mxu0
      %v777 = vadd.f32 0.0, %v776
      %778 = vdwg.mxu0
      %779 = vmatpush.msra.mxu0 0.0
      %780 = vmatpush.msra.mxu0 0.0
      %781 = vmatpush.msra.mxu0 0.0
      %782 = vmatpush.msra.mxu0 0.0
      %783 = vmatpush.msra.mxu0 0.0
      %784 = vmatpush.msra.mxu0 0.0
      %785 = vmatpush.msra.mxu0 0.0
      %786 = vmatpush.msra.mxu0 0.0
      %787 = vmatpush.msra.mxu0 0.0
      %788 = vmatpush.msra.mxu0 0.0
      %789 = vmatpush.msra.mxu0 0.0
      %790 = vmatpush.msra.mxu0 0.0
      %791 = vmatpush.msra.mxu0 0.0
      %792 = vmatpush.msra.mxu0 0.0
      %793 = vmatpush.msra.mxu0 0.0
      %794 = vmatpush.msra.mxu0 %v757
      %795 = vmatmul.f32.gmra.mxu0 %v753
      %v796 = vpop.f32.mrf.mxu0
      %v797 = vadd.f32 0.0, %v796
      %798 = vdwg.mxu0
      %v799 = vadd.f32 %v714, %v777
      %v800 = vadd.f32 %v734, %v797
      %v801 = vld [vmem:[%s3] sm:$0xf]
      %804 = vst [vmem:[#allocation1] ss:$2 sm:$0xff] %v397
      %s805 = scalar_lea.vmem [#allocation1], 16
      %806 = vst [vmem:[%s805] ss:$2 sm:$0xff] %v398
      %v807 = vld.sshfl [vmem:[#allocation1] sm:$0xff pattern:$0x75316420]
      %v808 = vld.sshfl [vmem:[#allocation1 + $0x8] sm:$0xff pattern:$0x75316420]
      %v809 = vld.sshfl [vmem:[#allocation1 + $0x10] sm:$0xff pattern:$0x75316420]
      %810 = vrot.lane.b32.xlu0 %v807, 111
      %v811 = vpop.permute.xlu0 %810
      %812 = vrot.lane.b32.xlu0 %v808, 111
      %v813 = vpop.permute.xlu0 %812
      %814 = vrot.lane.b32.xlu0 %v809, 111
      %v815 = vpop.permute.xlu0 %814
      %vm816 = vcmask 908288
      %v817 = vsel %vm816, %v811, %v813
      %v818 = vsel %vm816, %v813, %v815
      %v820 = vsel %vm422, %v801, 0
      %v822 = vsel %vm369, %v817, 0
      %v824 = vsel %vm369, %v818, 0
      %826 = vmatpush.msra.mxu0 0.0
      %827 = vmatpush.msra.mxu0 0.0
      %828 = vmatpush.msra.mxu0 0.0
      %829 = vmatpush.msra.mxu0 0.0
      %830 = vmatpush.msra.mxu0 0.0
      %831 = vmatpush.msra.mxu0 0.0
      %832 = vmatpush.msra.mxu0 0.0
      %833 = vmatpush.msra.mxu0 0.0
      %834 = vmatpush.msra.mxu0 0.0
      %835 = vmatpush.msra.mxu0 0.0
      %836 = vmatpush.msra.mxu0 0.0
      %837 = vmatpush.msra.mxu0 0.0
      %838 = vmatpush.msra.mxu0 0.0
      %839 = vmatpush.msra.mxu0 0.0
      %840 = vmatpush.msra.mxu0 0.0
      %841 = vmatpush.msra.mxu0 %v822
      %842 = vmatmul.f32.gmra.mxu0 %v820
      %v843 = vpop.f32.mrf.mxu0
      %v844 = vadd.f32 0.0, %v843
      %845 = vdwg.mxu0
      %846 = vmatpush.msra.mxu0 0.0
      %847 = vmatpush.msra.mxu0 0.0
      %848 = vmatpush.msra.mxu0 0.0
      %849 = vmatpush.msra.mxu0 0.0
      %850 = vmatpush.msra.mxu0 0.0
      %851 = vmatpush.msra.mxu0 0.0
      %852 = vmatpush.msra.mxu0 0.0
      %853 = vmatpush.msra.mxu0 0.0
      %854 = vmatpush.msra.mxu0 0.0
      %855 = vmatpush.msra.mxu0 0.0
      %856 = vmatpush.msra.mxu0 0.0
      %857 = vmatpush.msra.mxu0 0.0
      %858 = vmatpush.msra.mxu0 0.0
      %859 = vmatpush.msra.mxu0 0.0
      %860 = vmatpush.msra.mxu0 0.0
      %861 = vmatpush.msra.mxu0 %v824
      %862 = vmatmul.f32.gmra.mxu0 %v820
      %v863 = vpop.f32.mrf.mxu0
      %v864 = vadd.f32 0.0, %v863
      %865 = vdwg.mxu0
      %v866 = vadd.f32 %v799, %v844
      %v867 = vadd.f32 %v800, %v864
      %v868 = vld [vmem:[%s4] sm:$0xf]
      %v869 = vld [vmem:[%s5] sm:$0xff]
      %v870 = vld [vmem:[%s6] sm:$0xff]
      %872 = vset.pattern.permute.xlu0 0
      %873 = vperm.xlu0 %872, %v868
      %v874 = vpop.permute.xlu0 %873
      %v877 = vsel %vm422, %v400, 0
      %879 = vmatpush.msra.mxu0 0.0
      %880 = vmatpush.msra.mxu0 0.0
      %881 = vmatpush.msra.mxu0 0.0
      %882 = vmatpush.msra.mxu0 0.0
      %883 = vmatpush.msra.mxu0 0.0
      %884 = vmatpush.msra.mxu0 0.0
      %885 = vmatpush.msra.mxu0 0.0
      %886 = vmatpush.msra.mxu0 0.0
      %887 = vmatpush.msra.mxu0 0.0
      %888 = vmatpush.msra.mxu0 0.0
      %889 = vmatpush.msra.mxu0 0.0
      %890 = vmatpush.msra.mxu0 0.0
      %891 = vmatpush.msra.mxu0 0.0
      %892 = vmatpush.msra.mxu0 0.0
      %893 = vmatpush.msra.mxu0 0.0
      %894 = vmatpush.msra.mxu0 %v473
      %895 = vmatmul.f32.gmra.mxu0 %v877
      %v896 = vpop.f32.mrf.mxu0
      %v897 = vadd.f32 %v874, %v896
      %898 = vdwg.mxu0
      %899 = vmatpush.msra.mxu0 0.0
      %900 = vmatpush.msra.mxu0 0.0
      %901 = vmatpush.msra.mxu0 0.0
      %902 = vmatpush.msra.mxu0 0.0
      %903 = vmatpush.msra.mxu0 0.0
      %904 = vmatpush.msra.mxu0 0.0
      %905 = vmatpush.msra.mxu0 0.0
      %906 = vmatpush.msra.mxu0 0.0
      %907 = vmatpush.msra.mxu0 0.0
      %908 = vmatpush.msra.mxu0 0.0
      %909 = vmatpush.msra.mxu0 0.0
      %910 = vmatpush.msra.mxu0 0.0
      %911 = vmatpush.msra.mxu0 0.0
      %912 = vmatpush.msra.mxu0 0.0
      %913 = vmatpush.msra.mxu0 0.0
      %914 = vmatpush.msra.mxu0 %v475
      %915 = vmatmul.f32.gmra.mxu0 %v877
      %v916 = vpop.f32.mrf.mxu0
      %v917 = vadd.f32 %v874, %v916
      %918 = vdwg.mxu0
      %v919 = vmax.f32 %v897, 0.0
      %v920 = vmax.f32 %v917, 0.0
      %922 = vset.pattern.permute.xlu0 0
      %923 = vperm.xlu0 %922, %v870
      %v924 = vpop.permute.xlu0 %923
      %v927 = vsel %vm422, %v869, 0
      %v930 = vsel %vm369, %v919, 0
      %v933 = vsel %vm369, %v920, 0
      %935 = vmatpush.msra.mxu0 0.0
      %936 = vmatpush.msra.mxu0 0.0
      %937 = vmatpush.msra.mxu0 0.0
      %938 = vmatpush.msra.mxu0 0.0
      %939 = vmatpush.msra.mxu0 0.0
      %940 = vmatpush.msra.mxu0 0.0
      %941 = vmatpush.msra.mxu0 0.0
      %942 = vmatpush.msra.mxu0 0.0
      %943 = vmatpush.msra.mxu0 0.0
      %944 = vmatpush.msra.mxu0 0.0
      %945 = vmatpush.msra.mxu0 0.0
      %946 = vmatpush.msra.mxu0 0.0
      %947 = vmatpush.msra.mxu0 0.0
      %948 = vmatpush.msra.mxu0 0.0
      %949 = vmatpush.msra.mxu0 0.0
      %950 = vmatpush.msra.mxu0 %v930
      %951 = vmatmul.f32.gmra.mxu0 %v927
      %v952 = vpop.f32.mrf.mxu0
      %v953 = vadd.f32 %v924, %v952
      %954 = vdwg.mxu0
      %955 = vmatpush.msra.mxu0 0.0
      %956 = vmatpush.msra.mxu0 0.0
      %957 = vmatpush.msra.mxu0 0.0
      %958 = vmatpush.msra.mxu0 0.0
      %959 = vmatpush.msra.mxu0 0.0
      %960 = vmatpush.msra.mxu0 0.0
      %961 = vmatpush.msra.mxu0 0.0
      %962 = vmatpush.msra.mxu0 0.0
      %963 = vmatpush.msra.mxu0 0.0
      %964 = vmatpush.msra.mxu0 0.0
      %965 = vmatpush.msra.mxu0 0.0
      %966 = vmatpush.msra.mxu0 0.0
      %967 = vmatpush.msra.mxu0 0.0
      %968 = vmatpush.msra.mxu0 0.0
      %969 = vmatpush.msra.mxu0 0.0
      %970 = vmatpush.msra.mxu0 %v933
      %971 = vmatmul.f32.gmra.mxu0 %v927
      %v972 = vpop.f32.mrf.mxu0
      %v973 = vadd.f32 %v924, %v972
      %974 = vdwg.mxu0
      %v975 = vmax.f32 %v953, 0.0
      %v976 = vmax.f32 %v973, 0.0
      %977 = vst [vmem:[%s305] sm:$0xff] %v975
      %978 = vst [vmem:[%s305 + $0x8] sm:$0xff] %v976
      %v979 = vadd.f32 %v495, %v874
      %v980 = vadd.f32 %v515, %v874
      %v981 = vmax.f32 %v979, 0.0
      %v982 = vmax.f32 %v980, 0.0
      %v984 = vsel %vm369, %v981, 0
      %v987 = vsel %vm369, %v982, 0
      %989 = vmatpush.msra.mxu0 0.0
      %990 = vmatpush.msra.mxu0 0.0
      %991 = vmatpush.msra.mxu0 0.0
      %992 = vmatpush.msra.mxu0 0.0
      %993 = vmatpush.msra.mxu0 0.0
      %994 = vmatpush.msra.mxu0 0.0
      %995 = vmatpush.msra.mxu0 0.0
      %996 = vmatpush.msra.mxu0 0.0
      %997 = vmatpush.msra.mxu0 0.0
      %998 = vmatpush.msra.mxu0 0.0
      %999 = vmatpush.msra.mxu0 0.0
      %1000 = vmatpush.msra.mxu0 0.0
      %1001 = vmatpush.msra.mxu0 0.0
      %1002 = vmatpush.msra.mxu0 0.0
      %1003 = vmatpush.msra.mxu0 0.0
      %1004 = vmatpush.msra.mxu0 %v984
      %1005 = vmatmul.f32.gmra.mxu0 %v927
      %v1006 = vpop.f32.mrf.mxu0
      %v1007 = vadd.f32 %v924, %v1006
      %1008 = vdwg.mxu0
      %1009 = vmatpush.msra.mxu0 0.0
      %1010 = vmatpush.msra.mxu0 0.0
      %1011 = vmatpush.msra.mxu0 0.0
      %1012 = vmatpush.msra.mxu0 0.0
      %1013 = vmatpush.msra.mxu0 0.0
      %1014 = vmatpush.msra.mxu0 0.0
      %1015 = vmatpush.msra.mxu0 0.0
      %1016 = vmatpush.msra.mxu0 0.0
      %1017 = vmatpush.msra.mxu0 0.0
      %1018 = vmatpush.msra.mxu0 0.0
      %1019 = vmatpush.msra.mxu0 0.0
      %1020 = vmatpush.msra.mxu0 0.0
      %1021 = vmatpush.msra.mxu0 0.0
      %1022 = vmatpush.msra.mxu0 0.0
      %1023 = vmatpush.msra.mxu0 0.0
      %1024 = vmatpush.msra.mxu0 %v987
      %1025 = vmatmul.f32.gmra.mxu0 %v927
      %v1026 = vpop.f32.mrf.mxu0
      %v1027 = vadd.f32 %v924, %v1026
      %1028 = vdwg.mxu0
      %v1029 = vmax.f32 %v1007, 0.0
      %v1030 = vmax.f32 %v1027, 0.0
      %s1031 = scalar_lea.vmem %s305, 16
      %1032 = vst [vmem:[%s1031] sm:$0xff] %v1029
      %1033 = vst [vmem:[%s1031 + $0x8] sm:$0xff] %v1030
      %v1034 = vadd.f32 %v606, %v874
      %v1035 = vadd.f32 %v626, %v874
      %v1036 = vmax.f32 %v1034, 0.0
      %v1037 = vmax.f32 %v1035, 0.0
      %v1039 = vsel %vm369, %v1036, 0
      %v1042 = vsel %vm369, %v1037, 0
      %1044 = vmatpush.msra.mxu0 0.0
      %1045 = vmatpush.msra.mxu0 0.0
      %1046 = vmatpush.msra.mxu0 0.0
      %1047 = vmatpush.msra.mxu0 0.0
      %1048 = vmatpush.msra.mxu0 0.0
      %1049 = vmatpush.msra.mxu0 0.0
      %1050 = vmatpush.msra.mxu0 0.0
      %1051 = vmatpush.msra.mxu0 0.0
      %1052 = vmatpush.msra.mxu0 0.0
      %1053 = vmatpush.msra.mxu0 0.0
      %1054 = vmatpush.msra.mxu0 0.0
      %1055 = vmatpush.msra.mxu0 0.0
      %1056 = vmatpush.msra.mxu0 0.0
      %1057 = vmatpush.msra.mxu0 0.0
      %1058 = vmatpush.msra.mxu0 0.0
      %1059 = vmatpush.msra.mxu0 %v1039
      %1060 = vmatmul.f32.gmra.mxu0 %v927
      %v1061 = vpop.f32.mrf.mxu0
      %v1062 = vadd.f32 %v924, %v1061
      %1063 = vdwg.mxu0
      %1064 = vmatpush.msra.mxu0 0.0
      %1065 = vmatpush.msra.mxu0 0.0
      %1066 = vmatpush.msra.mxu0 0.0
      %1067 = vmatpush.msra.mxu0 0.0
      %1068 = vmatpush.msra.mxu0 0.0
      %1069 = vmatpush.msra.mxu0 0.0
      %1070 = vmatpush.msra.mxu0 0.0
      %1071 = vmatpush.msra.mxu0 0.0
      %1072 = vmatpush.msra.mxu0 0.0
      %1073 = vmatpush.msra.mxu0 0.0
      %1074 = vmatpush.msra.mxu0 0.0
      %1075 = vmatpush.msra.mxu0 0.0
      %1076 = vmatpush.msra.mxu0 0.0
      %1077 = vmatpush.msra.mxu0 0.0
      %1078 = vmatpush.msra.mxu0 0.0
      %1079 = vmatpush.msra.mxu0 %v1042
      %1080 = vmatmul.f32.gmra.mxu0 %v927
      %v1081 = vpop.f32.mrf.mxu0
      %v1082 = vadd.f32 %v924, %v1081
      %1083 = vdwg.mxu0
      %v1084 = vmax.f32 %v1062, 0.0
      %v1085 = vmax.f32 %v1082, 0.0
      %s1086 = scalar_lea.vmem %s305, 32
      %1087 = vst [vmem:[%s1086] sm:$0xff] %v1084
      %1088 = vst [vmem:[%s1086 + $0x8] sm:$0xff] %v1085
      %v1089 = vadd.f32 %v866, %v874
      %v1090 = vadd.f32 %v867, %v874
      %v1091 = vmax.f32 %v1089, 0.0
      %v1092 = vmax.f32 %v1090, 0.0
      %v1094 = vsel %vm369, %v1091, 0
      %v1097 = vsel %vm369, %v1092, 0
      %1099 = vmatpush.msra.mxu0 0.0
      %1100 = vmatpush.msra.mxu0 0.0
      %1101 = vmatpush.msra.mxu0 0.0
      %1102 = vmatpush.msra.mxu0 0.0
      %1103 = vmatpush.msra.mxu0 0.0
      %1104 = vmatpush.msra.mxu0 0.0
      %1105 = vmatpush.msra.mxu0 0.0
      %1106 = vmatpush.msra.mxu0 0.0
      %1107 = vmatpush.msra.mxu0 0.0
      %1108 = vmatpush.msra.mxu0 0.0
      %1109 = vmatpush.msra.mxu0 0.0
      %1110 = vmatpush.msra.mxu0 0.0
      %1111 = vmatpush.msra.mxu0 0.0
      %1112 = vmatpush.msra.mxu0 0.0
      %1113 = vmatpush.msra.mxu0 0.0
      %1114 = vmatpush.msra.mxu0 %v1094
      %1115 = vmatmul.f32.gmra.mxu0 %v927
      %v1116 = vpop.f32.mrf.mxu0
      %v1117 = vadd.f32 %v924, %v1116
      %1118 = vdwg.mxu0
      %1119 = vmatpush.msra.mxu0 0.0
      %1120 = vmatpush.msra.mxu0 0.0
      %1121 = vmatpush.msra.mxu0 0.0
      %1122 = vmatpush.msra.mxu0 0.0
      %1123 = vmatpush.msra.mxu0 0.0
      %1124 = vmatpush.msra.mxu0 0.0
      %1125 = vmatpush.msra.mxu0 0.0
      %1126 = vmatpush.msra.mxu0 0.0
      %1127 = vmatpush.msra.mxu0 0.0
      %1128 = vmatpush.msra.mxu0 0.0
      %1129 = vmatpush.msra.mxu0 0.0
      %1130 = vmatpush.msra.mxu0 0.0
      %1131 = vmatpush.msra.mxu0 0.0
      %1132 = vmatpush.msra.mxu0 0.0
      %1133 = vmatpush.msra.mxu0 0.0
      %1134 = vmatpush.msra.mxu0 %v1097
      %1135 = vmatmul.f32.gmra.mxu0 %v927
      %v1136 = vpop.f32.mrf.mxu0
      %v1137 = vadd.f32 %v924, %v1136
      %1138 = vdwg.mxu0
      %v1139 = vmax.f32 %v1117, 0.0
      %v1140 = vmax.f32 %v1137, 0.0
      %s1141 = scalar_lea.vmem %s305, 48
      %1142 = vst [vmem:[%s1141] sm:$0xff] %v1139
      %1143 = vst [vmem:[%s1141 + $0x8] sm:$0xff] %v1140
      %p1144 = scmp.lt.s32.totalorder %s19, 1
      %s1145 = scalar_select %p1144, %s19, 1
      %s1146 = smul.addr %s1145, 8
      %s1147 = smul.addr %s1146, 8
      %s1148 = scalar_lea.vmem %s8, %s1147
      // Predicated region
      $region53: #{decoder_block.1} parent=51 // pred_check
        %p1149 = pneg %p210
      $region54: #{decoder_block.1} parent=51 // pred_check_branch
        %1151 = sbr.rel (%p1149) target = $region56
      $region55: #{decoder_block.1} parent=51 // pred_region
        _
      $region56: #{decoder_block.1} parent=51 // pred_fallthru
        _
    $region52: #{decoder_block.1} parent=5 // pred_fallthru
      _
    %p1152 = scmp.le.s32.totalorder 2, %s14
    // Predicated region
    $region57: #{decoder_block.1} parent=5 // pred_check
      %p1153 = pneg %p1152
    $region58: #{decoder_block.1} parent=5 // pred_check_branch
      %1155 = sbr.rel (%p1153) target = $region60
    $region59: #{decoder_block.1} parent=5 // pred_region
      %s1156 = ssub.s32 %s14, 2
      // Predicated region
      $region61: #{decoder_block.1} parent=59 // pred_check
        %p1157 = pneg %p216
      $region62: #{decoder_block.1} parent=59 // pred_check_branch
        %1159 = sbr.rel (%p1157) target = $region64
      $region63: #{decoder_block.1} parent=59 // pred_region
        %p1160 = scmp.lt.s32.totalorder %s20, 1
        %s1161 = scalar_select %p1160, %s20, 1
        %s1162 = smul.addr %s1161, 8
        %s1163 = smul.addr %s1162, 8
        %s1164 = scalar_lea.vmem %s8, %s1163
      $region64: #{decoder_block.1} parent=59 // pred_fallthru
        _
    $region60: #{decoder_block.1} parent=5 // pred_fallthru
      _
  $region6: #{decoder_block.1} parent=0 // loop_footer
    %s18 = sadd.s32 1, %s14
  $region7: #{decoder_block.1} parent=0 // loop_footer_branch
    %13 = sbr.rel target = $region3
  $region8: #{decoder_block.1} parent=0 // loop_exit
    _

</llo_original>
